<compile_context>
chip_gen: v5e
topology: v5e:2x2
jax: 0.10.0
libtpu: 0.0.40
codegen_flags: <defaults>
</compile_context>

<pallas_src>
import functools

import numpy as np

import jax
import jax.numpy as jnp
from jax.experimental import pallas as pl
from jax.experimental.pallas import tpu as pltpu

LANE = 128
SUBLANE = 8


def _round_up(x, m):
    return (x + m - 1) // m * m


def _gelu(x):
    return jax.nn.gelu(x)


# ----------------------------------------------------------------------------
# Single fused kernel: one grid step == one BLOCK of Bb audio samples.
#   frames (Bb*T_pad, F_pad) -> framing matmul + GELU -> n residual dense+GELU
#   -> block-diagonal masked mean-pool over time (one MXU matmul for all Bb
#      samples) -> classifier -> (Bb, C_pad)
# All intermediates stay in VMEM / vregs; only the logits are stored to HBM.
# ----------------------------------------------------------------------------
def _fused_ser_kernel(x_ref, pool_ref, wf_ref, bf_ref, we_ref, be_ref,
                      wc_ref, bc_ref, o_ref, *, n_layers):
    # Framing "Conv1d" (kernel=stride=frame): M = Bb*T_pad >= 128 rows per pass.
    h = jnp.dot(x_ref[...], wf_ref[...], preferred_element_type=jnp.float32)
    h = _gelu(h + bf_ref[...])                                      # (Bb*T_pad, H_pad)

    # Residual dense + GELU encoder layers (unrolled; n_layers is tiny).
    for l in range(n_layers):
        y = jnp.dot(h, we_ref[l], preferred_element_type=jnp.float32) + be_ref[l]
        h = _gelu(y) + h

    # torch.mean(hidden, dim=1) for all Bb samples at once: precomputed
    # block-diagonal (Bb, Bb*T_pad) mask (1/T on each sample's valid time rows,
    # 0 on padded rows) rides the MXU and ignores time/batch padding.
    pooled = jnp.dot(pool_ref[...], h, preferred_element_type=jnp.float32)  # (Bb, H_pad)

    # normal_classifier (Linear) for the whole block.
    logits = jnp.dot(pooled, wc_ref[...], preferred_element_type=jnp.float32)
    logits = logits + bc_ref[...]                                   # (Bb, C_pad)

    o_ref[...] = logits.astype(o_ref.dtype)                         # unmasked 128-lane store


# ----------------------------------------------------------------------------
# One-time weight preparation (hoisted out of the per-call forward).
# Frame dim is padded only to the sublane multiple; H and C are padded to 128
# so activations / output stores are lane-dense.
# ----------------------------------------------------------------------------
def prepare_params(params):
    frame = params["frame"]
    H = params["w_feat"].shape[1]
    C = params["w_cls"].shape[1]
    F_pad = _round_up(frame, SUBLANE)          # 10 -> 16 (NOT 128)
    H_pad = _round_up(H, LANE)
    C_pad = _round_up(C, LANE)
    return {
        "w_feat": jnp.pad(params["w_feat"], ((0, F_pad - frame), (0, H_pad - H))),
        "b_feat": jnp.pad(params["b_feat"], ((0, 0), (0, H_pad - H))),
        "enc_w": jnp.pad(jnp.stack(params["enc_w"]),
                         ((0, 0), (0, H_pad - H), (0, H_pad - H))),
        "enc_b": jnp.pad(jnp.stack(params["enc_b"]),
                         ((0, 0), (0, 0), (0, H_pad - H))),
        "w_cls": jnp.pad(params["w_cls"], ((0, H_pad - H), (0, C_pad - C))),
        "b_cls": jnp.pad(params["b_cls"], ((0, 0), (0, C_pad - C))),
    }


# ----------------------------------------------------------------------------
# Forward pass of ModifiedWav2Vec2ModelforSER (cls path).
# ----------------------------------------------------------------------------
def modified_wav2vec2_ser_forward(input_values, prepared, *, frame, n_classes,
                                  block_batch=8):
    x = input_values.astype(jnp.float32)       # mirrors `.float()`
    B, L = x.shape
    T = L // frame

    F_pad, H_pad = prepared["w_feat"].shape
    C_pad = prepared["w_cls"].shape[1]
    n_layers = prepared["enc_w"].shape[0]

    T_pad = _round_up(T, SUBLANE)
    Bb = block_batch if B >= block_batch else B   # samples per grid step
    B_pad = _round_up(B, Bb)
    n_steps = B_pad // Bb
    rows = Bb * T_pad

    # Frame the raw audio; pad time to a sublane multiple, frame dim to 16,
    # batch to a multiple of the per-step block, then flatten to 2-D so each
    # grid step sees a lane-/sublane-aligned (Bb*T_pad, F_pad) slab.
    frames = x[:, :T * frame].reshape(B, T, frame)
    frames = jnp.pad(frames, ((0, B_pad - B), (0, T_pad - T), (0, F_pad - frame)))
    frames2d = frames.reshape(B_pad * T_pad, F_pad)

    # Precomputed block-diagonal mean-pool matrix (loop-invariant constant).
    pool_np = np.zeros((Bb, rows), np.float32)
    for i in range(Bb):
        pool_np[i, i * T_pad:i * T_pad + T] = 1.0 / T
    pool = jnp.asarray(pool_np)
    # TODO(synk): variable-length batches need per-sample lengths via scalar
    #             prefetch feeding this mask instead of a static constant.

    kern = functools.partial(_fused_ser_kernel, n_layers=n_layers)

    out = pl.pallas_call(
        kern,
        out_shape=jax.ShapeDtypeStruct((B_pad, C_pad), jnp.float32),
        grid=(n_steps,),
        in_specs=[
            pl.BlockSpec((rows, F_pad), lambda b: (b, 0)),                # frames block
            pl.BlockSpec((Bb, rows), lambda b: (0, 0)),                   # pool mask
            pl.BlockSpec((F_pad, H_pad), lambda b: (0, 0)),               # w_feat
            pl.BlockSpec((1, H_pad), lambda b: (0, 0)),                   # b_feat
            pl.BlockSpec((n_layers, H_pad, H_pad), lambda b: (0, 0, 0)),  # enc_w
            pl.BlockSpec((n_layers, 1, H_pad), lambda b: (0, 0, 0)),      # enc_b
            pl.BlockSpec((H_pad, C_pad), lambda b: (0, 0)),               # w_cls
            pl.BlockSpec((1, C_pad), lambda b: (0, 0)),                   # b_cls
        ],
        out_specs=pl.BlockSpec((Bb, C_pad), lambda b: (b, 0)),
        compiler_params=pltpu.CompilerParams(
            dimension_semantics=("parallel",)),   # sample blocks shard across TCs on v7x
    )(frames2d, pool, prepared["w_feat"], prepared["b_feat"],
      prepared["enc_w"], prepared["enc_b"], prepared["w_cls"], prepared["b_cls"])

    return out[:B, :n_classes]                    # (B, num_classes)


# Pure-JAX reference for a correctness sanity check (uses raw, unpadded params).
def _reference_forward(input_values, params):
    x = input_values.astype(jnp.float32)
    B, L = x.shape
    frame = params["frame"]
    T = L // frame
    h = _gelu(x[:, :T * frame].reshape(B * T, frame) @ params["w_feat"]
              + params["b_feat"])
    for w, b in zip(params["enc_w"], params["enc_b"]):
        h = _gelu(h @ w + b) + h
    hidden = h.reshape(B, T, -1)
    pooled = jnp.mean(hidden, axis=1)
    return pooled @ params["w_cls"] + params["b_cls"]


def make_params(key, *, frame=10, hidden=32, n_layers=3, n_classes=4):
    keys = jax.random.split(key, 2 + 2 * n_layers + 2)
    scale = 0.05
    params = {
        "frame": frame,
        "w_feat": scale * jax.random.normal(keys[0], (frame, hidden), jnp.float32),
        "b_feat": scale * jax.random.normal(keys[1], (1, hidden), jnp.float32),
        "enc_w": [],
        "enc_b": [],
        "w_cls": scale * jax.random.normal(keys[-2], (hidden, n_classes), jnp.float32),
        "b_cls": scale * jax.random.normal(keys[-1], (1, n_classes), jnp.float32),
    }
    for l in range(n_layers):
        params["enc_w"].append(
            scale * jax.random.normal(keys[2 + 2 * l], (hidden, hidden), jnp.float32))
        params["enc_b"].append(
            scale * jax.random.normal(keys[3 + 2 * l], (1, hidden), jnp.float32))
    return params


if __name__ == "__main__":
    key = jax.random.PRNGKey(0)
    pkey, xkey = jax.random.split(key)

    # 16 raw-audio clips of 160 samples -> T=16 frames of 10; H=32; 4 classes.
    B, L, frame, hidden, n_layers, n_classes = 16, 160, 10, 32, 3, 4
    params = make_params(pkey, frame=frame, hidden=hidden,
                         n_layers=n_layers, n_classes=n_classes)
    prepared = prepare_params(params)          # one-time padding, outside the forward
    input_values = jax.random.normal(xkey, (B, L), jnp.float32)

    fwd = jax.jit(functools.partial(modified_wav2vec2_ser_forward,
                                    frame=frame, n_classes=n_classes,
                                    block_batch=8))
    logits = jax.block_until_ready(fwd(input_values, prepared))

    ref = _reference_forward(input_values, params)
    assert logits.shape == (B, n_classes)
    assert jnp.allclose(logits, ref, atol=1e-4, rtol=1e-4)

    print("KERNEL_OK")
</pallas_src>

<mosaic_0001>
module attributes {stable_mosaic.version = 11 : i64} {
  func.func @_fused_ser_kernel(%arg0: i32, %arg1: memref<128x16xf32, #tpu.memory_space<vmem>>, %arg2: memref<8x128xf32, #tpu.memory_space<vmem>>, %arg3: memref<16x128xf32, #tpu.memory_space<vmem>>, %arg4: memref<1x128xf32, #tpu.memory_space<vmem>>, %arg5: memref<3x128x128xf32, #tpu.memory_space<vmem>>, %arg6: memref<3x1x128xf32, #tpu.memory_space<vmem>>, %arg7: memref<128x128xf32, #tpu.memory_space<vmem>>, %arg8: memref<1x128xf32, #tpu.memory_space<vmem>>, %arg9: memref<8x128xf32, #tpu.memory_space<vmem>>) attributes {dimension_semantics = [#tpu.dimension_semantics<parallel>], iteration_bounds = array<i64: 2>, scalar_prefetch = 0 : i64, scratch_operands = 0 : i64, tpu.core_type = #tpu.core_type<tc>, window_params = [{transform_indices = @transform_0, window_bounds = array<i64: 128, 16>}, {pipeline_mode = #tpu.pipeline_mode<synchronous>, transform_indices = @transform_1, window_bounds = array<i64: 8, 128>}, {pipeline_mode = #tpu.pipeline_mode<synchronous>, transform_indices = @transform_2, window_bounds = array<i64: 16, 128>}, {pipeline_mode = #tpu.pipeline_mode<synchronous>, transform_indices = @transform_3, window_bounds = array<i64: 1, 128>}, {pipeline_mode = #tpu.pipeline_mode<synchronous>, transform_indices = @transform_4, window_bounds = array<i64: 3, 128, 128>}, {pipeline_mode = #tpu.pipeline_mode<synchronous>, transform_indices = @transform_5, window_bounds = array<i64: 3, 1, 128>}, {pipeline_mode = #tpu.pipeline_mode<synchronous>, transform_indices = @transform_6, window_bounds = array<i64: 128, 128>}, {pipeline_mode = #tpu.pipeline_mode<synchronous>, transform_indices = @transform_7, window_bounds = array<i64: 1, 128>}, {transform_indices = @transform_8, window_bounds = array<i64: 8, 128>}]} {
    %c0 = arith.constant 0 : index
    %c0_0 = arith.constant 0 : index
    %0 = vector.load %arg1[%c0, %c0_0] : memref<128x16xf32, #tpu.memory_space<vmem>>, vector<128x16xf32>
    %c0_1 = arith.constant 0 : index
    %c0_2 = arith.constant 0 : index
    %1 = vector.load %arg3[%c0_1, %c0_2] : memref<16x128xf32, #tpu.memory_space<vmem>>, vector<16x128xf32>
    %cst = arith.constant dense<0.000000e+00> : vector<128x128xf32>
    %2 = tpu.matmul %0, %1, %cst {dimension_numbers = #tpu.dot_dimension_numbers<[1], [0], [0], [1], [0, 0, 1, 1], [], []>} : vector<128x16xf32>, vector<16x128xf32>, vector<128x128xf32> -> vector<128x128xf32>
    %c0_3 = arith.constant 0 : index
    %c0_4 = arith.constant 0 : index
    %3 = vector.load %arg4[%c0_3, %c0_4] : memref<1x128xf32, #tpu.memory_space<vmem>>, vector<1x128xf32>
    %4 = vector.broadcast %3 : vector<1x128xf32> to vector<128x128xf32>
    %5 = arith.addf %2, %4 : vector<128x128xf32>
    %6 = arith.mulf %5, %5 : vector<128x128xf32>
    %7 = arith.mulf %5, %6 : vector<128x128xf32>
    %cst_5 = arith.constant 4.471500e-02 : f32
    %8 = vector.broadcast %cst_5 : f32 to vector<128x128xf32>
    %9 = arith.mulf %8, %7 : vector<128x128xf32>
    %10 = arith.addf %5, %9 : vector<128x128xf32>
    %cst_6 = arith.constant 0.797884583 : f32
    %11 = vector.broadcast %cst_6 : f32 to vector<128x128xf32>
    %12 = arith.mulf %11, %10 : vector<128x128xf32>
    %13 = math.tanh %12 : vector<128x128xf32>
    %cst_7 = arith.constant 1.000000e+00 : f32
    %14 = vector.broadcast %cst_7 : f32 to vector<128x128xf32>
    %15 = arith.addf %14, %13 : vector<128x128xf32>
    %cst_8 = arith.constant 5.000000e-01 : f32
    %16 = vector.broadcast %cst_8 : f32 to vector<128x128xf32>
    %17 = arith.mulf %16, %15 : vector<128x128xf32>
    %18 = arith.mulf %5, %17 : vector<128x128xf32>
    %c0_9 = arith.constant 0 : index
    %c0_10 = arith.constant 0 : index
    %c0_11 = arith.constant 0 : index
    %19 = vector.load %arg5[%c0_9, %c0_10, %c0_11] : memref<3x128x128xf32, #tpu.memory_space<vmem>>, vector<1x128x128xf32>
    %20 = vector.shape_cast %19 : vector<1x128x128xf32> to vector<128x128xf32>
    %cst_12 = arith.constant dense<0.000000e+00> : vector<128x128xf32>
    %21 = tpu.matmul %18, %20, %cst_12 {dimension_numbers = #tpu.dot_dimension_numbers<[1], [0], [0], [1], [0, 0, 1, 1], [], []>} : vector<128x128xf32>, vector<128x128xf32>, vector<128x128xf32> -> vector<128x128xf32>
    %c0_13 = arith.constant 0 : index
    %c0_14 = arith.constant 0 : index
    %c0_15 = arith.constant 0 : index
    %22 = vector.load %arg6[%c0_13, %c0_14, %c0_15] : memref<3x1x128xf32, #tpu.memory_space<vmem>>, vector<1x1x128xf32>
    %23 = vector.shape_cast %22 : vector<1x1x128xf32> to vector<1x128xf32>
    %24 = vector.broadcast %23 : vector<1x128xf32> to vector<128x128xf32>
    %25 = arith.addf %21, %24 : vector<128x128xf32>
    %26 = arith.mulf %25, %25 : vector<128x128xf32>
    %27 = arith.mulf %25, %26 : vector<128x128xf32>
    %cst_16 = arith.constant 4.471500e-02 : f32
    %28 = vector.broadcast %cst_16 : f32 to vector<128x128xf32>
    %29 = arith.mulf %28, %27 : vector<128x128xf32>
    %30 = arith.addf %25, %29 : vector<128x128xf32>
    %cst_17 = arith.constant 0.797884583 : f32
    %31 = vector.broadcast %cst_17 : f32 to vector<128x128xf32>
    %32 = arith.mulf %31, %30 : vector<128x128xf32>
    %33 = math.tanh %32 : vector<128x128xf32>
    %cst_18 = arith.constant 1.000000e+00 : f32
    %34 = vector.broadcast %cst_18 : f32 to vector<128x128xf32>
    %35 = arith.addf %34, %33 : vector<128x128xf32>
    %cst_19 = arith.constant 5.000000e-01 : f32
    %36 = vector.broadcast %cst_19 : f32 to vector<128x128xf32>
    %37 = arith.mulf %36, %35 : vector<128x128xf32>
    %38 = arith.mulf %25, %37 : vector<128x128xf32>
    %39 = arith.addf %38, %18 : vector<128x128xf32>
    %c1 = arith.constant 1 : index
    %c0_20 = arith.constant 0 : index
    %c0_21 = arith.constant 0 : index
    %40 = vector.load %arg5[%c1, %c0_20, %c0_21] : memref<3x128x128xf32, #tpu.memory_space<vmem>>, vector<1x128x128xf32>
    %41 = vector.shape_cast %40 : vector<1x128x128xf32> to vector<128x128xf32>
    %cst_22 = arith.constant dense<0.000000e+00> : vector<128x128xf32>
    %42 = tpu.matmul %39, %41, %cst_22 {dimension_numbers = #tpu.dot_dimension_numbers<[1], [0], [0], [1], [0, 0, 1, 1], [], []>} : vector<128x128xf32>, vector<128x128xf32>, vector<128x128xf32> -> vector<128x128xf32>
    %c1_23 = arith.constant 1 : index
    %c0_24 = arith.constant 0 : index
    %c0_25 = arith.constant 0 : index
    %43 = vector.load %arg6[%c1_23, %c0_24, %c0_25] : memref<3x1x128xf32, #tpu.memory_space<vmem>>, vector<1x1x128xf32>
    %44 = vector.shape_cast %43 : vector<1x1x128xf32> to vector<1x128xf32>
    %45 = vector.broadcast %44 : vector<1x128xf32> to vector<128x128xf32>
    %46 = arith.addf %42, %45 : vector<128x128xf32>
    %47 = arith.mulf %46, %46 : vector<128x128xf32>
    %48 = arith.mulf %46, %47 : vector<128x128xf32>
    %cst_26 = arith.constant 4.471500e-02 : f32
    %49 = vector.broadcast %cst_26 : f32 to vector<128x128xf32>
    %50 = arith.mulf %49, %48 : vector<128x128xf32>
    %51 = arith.addf %46, %50 : vector<128x128xf32>
    %cst_27 = arith.constant 0.797884583 : f32
    %52 = vector.broadcast %cst_27 : f32 to vector<128x128xf32>
    %53 = arith.mulf %52, %51 : vector<128x128xf32>
    %54 = math.tanh %53 : vector<128x128xf32>
    %cst_28 = arith.constant 1.000000e+00 : f32
    %55 = vector.broadcast %cst_28 : f32 to vector<128x128xf32>
    %56 = arith.addf %55, %54 : vector<128x128xf32>
    %cst_29 = arith.constant 5.000000e-01 : f32
    %57 = vector.broadcast %cst_29 : f32 to vector<128x128xf32>
    %58 = arith.mulf %57, %56 : vector<128x128xf32>
    %59 = arith.mulf %46, %58 : vector<128x128xf32>
    %60 = arith.addf %59, %39 : vector<128x128xf32>
    %c2 = arith.constant 2 : index
    %c0_30 = arith.constant 0 : index
    %c0_31 = arith.constant 0 : index
    %61 = vector.load %arg5[%c2, %c0_30, %c0_31] : memref<3x128x128xf32, #tpu.memory_space<vmem>>, vector<1x128x128xf32>
    %62 = vector.shape_cast %61 : vector<1x128x128xf32> to vector<128x128xf32>
    %cst_32 = arith.constant dense<0.000000e+00> : vector<128x128xf32>
    %63 = tpu.matmul %60, %62, %cst_32 {dimension_numbers = #tpu.dot_dimension_numbers<[1], [0], [0], [1], [0, 0, 1, 1], [], []>} : vector<128x128xf32>, vector<128x128xf32>, vector<128x128xf32> -> vector<128x128xf32>
    %c2_33 = arith.constant 2 : index
    %c0_34 = arith.constant 0 : index
    %c0_35 = arith.constant 0 : index
    %64 = vector.load %arg6[%c2_33, %c0_34, %c0_35] : memref<3x1x128xf32, #tpu.memory_space<vmem>>, vector<1x1x128xf32>
    %65 = vector.shape_cast %64 : vector<1x1x128xf32> to vector<1x128xf32>
    %66 = vector.broadcast %65 : vector<1x128xf32> to vector<128x128xf32>
    %67 = arith.addf %63, %66 : vector<128x128xf32>
    %68 = arith.mulf %67, %67 : vector<128x128xf32>
    %69 = arith.mulf %67, %68 : vector<128x128xf32>
    %cst_36 = arith.constant 4.471500e-02 : f32
    %70 = vector.broadcast %cst_36 : f32 to vector<128x128xf32>
    %71 = arith.mulf %70, %69 : vector<128x128xf32>
    %72 = arith.addf %67, %71 : vector<128x128xf32>
    %cst_37 = arith.constant 0.797884583 : f32
    %73 = vector.broadcast %cst_37 : f32 to vector<128x128xf32>
    %74 = arith.mulf %73, %72 : vector<128x128xf32>
    %75 = math.tanh %74 : vector<128x128xf32>
    %cst_38 = arith.constant 1.000000e+00 : f32
    %76 = vector.broadcast %cst_38 : f32 to vector<128x128xf32>
    %77 = arith.addf %76, %75 : vector<128x128xf32>
    %cst_39 = arith.constant 5.000000e-01 : f32
    %78 = vector.broadcast %cst_39 : f32 to vector<128x128xf32>
    %79 = arith.mulf %78, %77 : vector<128x128xf32>
    %80 = arith.mulf %67, %79 : vector<128x128xf32>
    %81 = arith.addf %80, %60 : vector<128x128xf32>
    %c0_40 = arith.constant 0 : index
    %c0_41 = arith.constant 0 : index
    %82 = vector.load %arg2[%c0_40, %c0_41] : memref<8x128xf32, #tpu.memory_space<vmem>>, vector<8x128xf32>
    %cst_42 = arith.constant dense<0.000000e+00> : vector<8x128xf32>
    %83 = tpu.matmul %82, %81, %cst_42 {dimension_numbers = #tpu.dot_dimension_numbers<[1], [0], [0], [1], [0, 0, 1, 1], [], []>} : vector<8x128xf32>, vector<128x128xf32>, vector<8x128xf32> -> vector<8x128xf32>
    %c0_43 = arith.constant 0 : index
    %c0_44 = arith.constant 0 : index
    %84 = vector.load %arg7[%c0_43, %c0_44] : memref<128x128xf32, #tpu.memory_space<vmem>>, vector<128x128xf32>
    %cst_45 = arith.constant dense<0.000000e+00> : vector<8x128xf32>
    %85 = tpu.matmul %83, %84, %cst_45 {dimension_numbers = #tpu.dot_dimension_numbers<[1], [0], [0], [1], [0, 0, 1, 1], [], []>} : vector<8x128xf32>, vector<128x128xf32>, vector<8x128xf32> -> vector<8x128xf32>
    %c0_46 = arith.constant 0 : index
    %c0_47 = arith.constant 0 : index
    %86 = vector.load %arg8[%c0_46, %c0_47] : memref<1x128xf32, #tpu.memory_space<vmem>>, vector<1x128xf32>
    %87 = vector.broadcast %86 : vector<1x128xf32> to vector<8x128xf32>
    %88 = arith.addf %85, %87 : vector<8x128xf32>
    %c0_48 = arith.constant 0 : index
    %c0_49 = arith.constant 0 : index
    %89 = vector.load %arg9[%c0_48, %c0_49] : memref<8x128xf32, #tpu.memory_space<vmem>>, vector<8x128xf32>
    tpu.vector_store %arg9[%c0_48, %c0_49], %88 {strides = array<i32>} : memref<8x128xf32, #tpu.memory_space<vmem>>, vector<8x128xf32>,
    return
  }
  func.func @transform_0(%arg0: i32) -> (i32, i32) {
    %c0_i32 = arith.constant 0 : i32
    %c0_i32_0 = arith.constant 0 : i32
    return %arg0, %c0_i32 : i32, i32
  }
  func.func @transform_1(%arg0: i32) -> (i32, i32) {
    %c0_i32 = arith.constant 0 : i32
    %c0_i32_0 = arith.constant 0 : i32
    %c0_i32_1 = arith.constant 0 : i32
    return %c0_i32, %c0_i32_0 : i32, i32
  }
  func.func @transform_2(%arg0: i32) -> (i32, i32) {
    %c0_i32 = arith.constant 0 : i32
    %c0_i32_0 = arith.constant 0 : i32
    %c0_i32_1 = arith.constant 0 : i32
    return %c0_i32, %c0_i32_0 : i32, i32
  }
  func.func @transform_3(%arg0: i32) -> (i32, i32) {
    %c0_i32 = arith.constant 0 : i32
    %c0_i32_0 = arith.constant 0 : i32
    %c0_i32_1 = arith.constant 0 : i32
    return %c0_i32, %c0_i32_0 : i32, i32
  }
  func.func @transform_4(%arg0: i32) -> (i32, i32, i32) {
    %c0_i32 = arith.constant 0 : i32
    %c0_i32_0 = arith.constant 0 : i32
    %c0_i32_1 = arith.constant 0 : i32
    %c0_i32_2 = arith.constant 0 : i32
    return %c0_i32, %c0_i32_0, %c0_i32_1 : i32, i32, i32
  }
  func.func @transform_5(%arg0: i32) -> (i32, i32, i32) {
    %c0_i32 = arith.constant 0 : i32
    %c0_i32_0 = arith.constant 0 : i32
    %c0_i32_1 = arith.constant 0 : i32
    %c0_i32_2 = arith.constant 0 : i32
    return %c0_i32, %c0_i32_0, %c0_i32_1 : i32, i32, i32
  }
  func.func @transform_6(%arg0: i32) -> (i32, i32) {
    %c0_i32 = arith.constant 0 : i32
    %c0_i32_0 = arith.constant 0 : i32
    %c0_i32_1 = arith.constant 0 : i32
    return %c0_i32, %c0_i32_0 : i32, i32
  }
  func.func @transform_7(%arg0: i32) -> (i32, i32) {
    %c0_i32 = arith.constant 0 : i32
    %c0_i32_0 = arith.constant 0 : i32
    %c0_i32_1 = arith.constant 0 : i32
    return %c0_i32, %c0_i32_0 : i32, i32
  }
  func.func @transform_8(%arg0: i32) -> (i32, i32) {
    %c0_i32 = arith.constant 0 : i32
    %c0_i32_0 = arith.constant 0 : i32
    return %arg0, %c0_i32 : i32, i32
  }
}

</mosaic_0001>

<llo_original>
// kernel: modified_wav2vec2_ser_forward.1
$region0: #{modified_wav2vec2_ser_forward.1}
  #allocation0 [shape = 'u32[]', space=smem, size = 0x4, offset = 0x4, fixed_abs, tag = 'smem constant byte address 0x4 - core index']
  #allocation1 [shape = 'u32[72,128]{1,0:T(1,128)}', space=vmem, size = 0x9000, scoped, tag = 'internal scratch']
  %s0 = inlined_call_operand.vmem [shape: f32[256,16], index: 0, kind: input, shape index: {}]
  %s1 = inlined_call_operand.vmem [shape: f32[8,128], index: 1, kind: input, shape index: {}]
  %s2 = inlined_call_operand.vmem [shape: f32[16,128], index: 2, kind: input, shape index: {}]
  %s3 = inlined_call_operand.vmem [shape: f32[1,128], index: 3, kind: input, shape index: {}]
  %s4 = inlined_call_operand.vmem [shape: f32[3,128,128], index: 4, kind: input, shape index: {}]
  %s5 = inlined_call_operand.vmem [shape: f32[3,1,128], index: 5, kind: input, shape index: {}]
  %s6 = inlined_call_operand.vmem [shape: f32[128,128], index: 6, kind: input, shape index: {}]
  %s7 = inlined_call_operand.vmem [shape: f32[1,128], index: 7, kind: input, shape index: {}]
  %s8 = inlined_call_operand.vmem [shape: f32[16,128], index: 8, kind: output, shape index: {}]
  %s9 = sld [smem:[#allocation0]]
  $region65: #{modified_wav2vec2_ser_forward.1} parent=0
    _
  %s11 = ssub.s32 1, %s9
  %s12 = scalar_select 0, %s11, %s9
  loop: start=0, step=1, limit=4
  $region2: #{modified_wav2vec2_ser_forward.1} parent=0 // loop_pre_header
    _
  $region3: #{modified_wav2vec2_ser_forward.1} parent=0 // loop_header
    %s14 = sphi 0, %s18
    %p15 = scmp.ge.s32.totalorder %s14, 4
    %s24 = sphi 0, %s26
    %s27 = sphi 0, %s24
    %s28 = sphi 0, %s27
    %s44 = sphi 0, %s28
    %s48 = sphi 0, %s48
    %s50 = sphi 0, %s48
    %s51 = sphi 0, %s50
    %s65 = sphi 0, %s51
    %s69 = sphi 0, %s69
    %s71 = sphi 0, %s69
    %s72 = sphi 0, %s71
    %s86 = sphi 0, %s72
    %s90 = sphi 0, %s90
    %s92 = sphi 0, %s90
    %s93 = sphi 0, %s92
    %s107 = sphi 0, %s93
    %s111 = sphi 0, %s111
    %s113 = sphi 0, %s111
    %s114 = sphi 0, %s113
    %s128 = sphi 0, %s114
    %s132 = sphi 0, %s132
    %s134 = sphi 0, %s132
    %s135 = sphi 0, %s134
    %s149 = sphi 0, %s135
    %s153 = sphi 0, %s153
    %s155 = sphi 0, %s153
    %s156 = sphi 0, %s155
    %s170 = sphi 0, %s156
    %s174 = sphi 0, %s174
    %s176 = sphi 0, %s174
    %s177 = sphi 0, %s176
    %s191 = sphi 0, %s177
    %s197 = sphi 0, %s199
    %s200 = sphi 0, %s197
    %s201 = sphi 0, %s200
    %s217 = sphi 0, %s201
  $region4: #{modified_wav2vec2_ser_forward.1} parent=0 // loop_header_branch
    %17 = sbr.rel (%p15) target = $region8
  $region5: #{modified_wav2vec2_ser_forward.1} parent=0 // loop_body
    %s19 = ssub.s32 %s14, 1
    %s20 = ssub.s32 %s14, 2
    %s21 = sadd.s32 %s14, 1
    %s22 = ssub.s32 %s14, %s21
    %p23 = scmp.eq.s32.totalorder %s22, 0
    %s25 = sadd.s32 %s24, 1
    %s26 = scalar_select %p23, %s24, %s25
    %p29 = pneg %p23
    %p30 = scmp.eq.s32.totalorder %s14, 1
    %p31 = por %p29, %p30
    %p32 = scmp.ne.s32.totalorder %s24, %s27
    %p33 = scmp.eq.s32.totalorder %s14, 0
    %p34 = por %p32, %p33
    %p35 = scmp.ne.s32.totalorder %s24, %s27
    %p36 = scmp.eq.s32.totalorder %s19, 1
    %p37 = por %p35, %p36
    %p38 = scmp.ne.s32.totalorder %s27, %s28
    %p39 = scmp.eq.s32.totalorder %s19, 0
    %p40 = por %p38, %p39
    %p41 = scmp.ne.s32.totalorder %s27, %s28
    %p42 = scmp.eq.s32.totalorder %s20, 1
    %p43 = por %p41, %p42
    %p45 = scmp.ne.s32.totalorder %s28, %s44
    %p46 = scmp.eq.s32.totalorder %s20, 0
    %p47 = por %p45, %p46
    %s49 = sadd.s32 %s48, 1
    %p52 = scmp.eq.s32.totalorder %s14, 1
    %p53 = scmp.ne.s32.totalorder %s48, %s50
    %p54 = scmp.eq.s32.totalorder %s14, 0
    %p55 = por %p53, %p54
    %p56 = scmp.ne.s32.totalorder %s48, %s50
    %p57 = scmp.eq.s32.totalorder %s19, 1
    %p58 = por %p56, %p57
    %p59 = scmp.ne.s32.totalorder %s50, %s51
    %p60 = scmp.eq.s32.totalorder %s19, 0
    %p61 = por %p59, %p60
    %p62 = scmp.ne.s32.totalorder %s50, %s51
    %p63 = scmp.eq.s32.totalorder %s20, 1
    %p64 = por %p62, %p63
    %p66 = scmp.ne.s32.totalorder %s51, %s65
    %p67 = scmp.eq.s32.totalorder %s20, 0
    %p68 = por %p66, %p67
    %s70 = sadd.s32 %s69, 1
    %p73 = scmp.eq.s32.totalorder %s14, 1
    %p74 = scmp.ne.s32.totalorder %s69, %s71
    %p75 = scmp.eq.s32.totalorder %s14, 0
    %p76 = por %p74, %p75
    %p77 = scmp.ne.s32.totalorder %s69, %s71
    %p78 = scmp.eq.s32.totalorder %s19, 1
    %p79 = por %p77, %p78
    %p80 = scmp.ne.s32.totalorder %s71, %s72
    %p81 = scmp.eq.s32.totalorder %s19, 0
    %p82 = por %p80, %p81
    %p83 = scmp.ne.s32.totalorder %s71, %s72
    %p84 = scmp.eq.s32.totalorder %s20, 1
    %p85 = por %p83, %p84
    %p87 = scmp.ne.s32.totalorder %s72, %s86
    %p88 = scmp.eq.s32.totalorder %s20, 0
    %p89 = por %p87, %p88
    %s91 = sadd.s32 %s90, 1
    %p94 = scmp.eq.s32.totalorder %s14, 1
    %p95 = scmp.ne.s32.totalorder %s90, %s92
    %p96 = scmp.eq.s32.totalorder %s14, 0
    %p97 = por %p95, %p96
    %p98 = scmp.ne.s32.totalorder %s90, %s92
    %p99 = scmp.eq.s32.totalorder %s19, 1
    %p100 = por %p98, %p99
    %p101 = scmp.ne.s32.totalorder %s92, %s93
    %p102 = scmp.eq.s32.totalorder %s19, 0
    %p103 = por %p101, %p102
    %p104 = scmp.ne.s32.totalorder %s92, %s93
    %p105 = scmp.eq.s32.totalorder %s20, 1
    %p106 = por %p104, %p105
    %p108 = scmp.ne.s32.totalorder %s93, %s107
    %p109 = scmp.eq.s32.totalorder %s20, 0
    %p110 = por %p108, %p109
    %s112 = sadd.s32 %s111, 1
    %p115 = scmp.eq.s32.totalorder %s14, 1
    %p116 = scmp.ne.s32.totalorder %s111, %s113
    %p117 = scmp.eq.s32.totalorder %s14, 0
    %p118 = por %p116, %p117
    %p119 = scmp.ne.s32.totalorder %s111, %s113
    %p120 = scmp.eq.s32.totalorder %s19, 1
    %p121 = por %p119, %p120
    %p122 = scmp.ne.s32.totalorder %s113, %s114
    %p123 = scmp.eq.s32.totalorder %s19, 0
    %p124 = por %p122, %p123
    %p125 = scmp.ne.s32.totalorder %s113, %s114
    %p126 = scmp.eq.s32.totalorder %s20, 1
    %p127 = por %p125, %p126
    %p129 = scmp.ne.s32.totalorder %s114, %s128
    %p130 = scmp.eq.s32.totalorder %s20, 0
    %p131 = por %p129, %p130
    %s133 = sadd.s32 %s132, 1
    %p136 = scmp.eq.s32.totalorder %s14, 1
    %p137 = scmp.ne.s32.totalorder %s132, %s134
    %p138 = scmp.eq.s32.totalorder %s14, 0
    %p139 = por %p137, %p138
    %p140 = scmp.ne.s32.totalorder %s132, %s134
    %p141 = scmp.eq.s32.totalorder %s19, 1
    %p142 = por %p140, %p141
    %p143 = scmp.ne.s32.totalorder %s134, %s135
    %p144 = scmp.eq.s32.totalorder %s19, 0
    %p145 = por %p143, %p144
    %p146 = scmp.ne.s32.totalorder %s134, %s135
    %p147 = scmp.eq.s32.totalorder %s20, 1
    %p148 = por %p146, %p147
    %p150 = scmp.ne.s32.totalorder %s135, %s149
    %p151 = scmp.eq.s32.totalorder %s20, 0
    %p152 = por %p150, %p151
    %s154 = sadd.s32 %s153, 1
    %p157 = scmp.eq.s32.totalorder %s14, 1
    %p158 = scmp.ne.s32.totalorder %s153, %s155
    %p159 = scmp.eq.s32.totalorder %s14, 0
    %p160 = por %p158, %p159
    %p161 = scmp.ne.s32.totalorder %s153, %s155
    %p162 = scmp.eq.s32.totalorder %s19, 1
    %p163 = por %p161, %p162
    %p164 = scmp.ne.s32.totalorder %s155, %s156
    %p165 = scmp.eq.s32.totalorder %s19, 0
    %p166 = por %p164, %p165
    %p167 = scmp.ne.s32.totalorder %s155, %s156
    %p168 = scmp.eq.s32.totalorder %s20, 1
    %p169 = por %p167, %p168
    %p171 = scmp.ne.s32.totalorder %s156, %s170
    %p172 = scmp.eq.s32.totalorder %s20, 0
    %p173 = por %p171, %p172
    %s175 = sadd.s32 %s174, 1
    %p178 = scmp.eq.s32.totalorder %s14, 1
    %p179 = scmp.ne.s32.totalorder %s174, %s176
    %p180 = scmp.eq.s32.totalorder %s14, 0
    %p181 = por %p179, %p180
    %p182 = scmp.ne.s32.totalorder %s174, %s176
    %p183 = scmp.eq.s32.totalorder %s19, 1
    %p184 = por %p182, %p183
    %p185 = scmp.ne.s32.totalorder %s176, %s177
    %p186 = scmp.eq.s32.totalorder %s19, 0
    %p187 = por %p185, %p186
    %p188 = scmp.ne.s32.totalorder %s176, %s177
    %p189 = scmp.eq.s32.totalorder %s20, 1
    %p190 = por %p188, %p189
    %p192 = scmp.ne.s32.totalorder %s177, %s191
    %p193 = scmp.eq.s32.totalorder %s20, 0
    %p194 = por %p192, %p193
    %s195 = ssub.s32 %s14, %s21
    %p196 = scmp.eq.s32.totalorder %s195, 0
    %s198 = sadd.s32 %s197, 1
    %s199 = scalar_select %p196, %s197, %s198
    %p202 = pneg %p196
    %p203 = scmp.eq.s32.totalorder %s14, 1
    %p204 = por %p202, %p203
    %p205 = scmp.ne.s32.totalorder %s197, %s200
    %p206 = scmp.eq.s32.totalorder %s14, 0
    %p207 = por %p205, %p206
    %p208 = scmp.ne.s32.totalorder %s197, %s200
    %p209 = scmp.eq.s32.totalorder %s19, 1
    %p210 = por %p208, %p209
    %p211 = scmp.ne.s32.totalorder %s200, %s201
    %p212 = scmp.eq.s32.totalorder %s19, 0
    %p213 = por %p211, %p212
    %p214 = scmp.ne.s32.totalorder %s200, %s201
    %p215 = scmp.eq.s32.totalorder %s20, 1
    %p216 = por %p214, %p215
    %p218 = scmp.ne.s32.totalorder %s201, %s217
    %p219 = scmp.eq.s32.totalorder %s20, 0
    %p220 = por %p218, %p219
    %p221 = scmp.le.s32.totalorder 1, %s14
    %p222 = scmp.lt.s32.totalorder %s14, 3
    %p223 = pnand %p221, %p222
    %p224 = pneg %p223
    // Predicated region
    $region9: #{modified_wav2vec2_ser_forward.1} parent=5 // pred_check
      _
    $region10: #{modified_wav2vec2_ser_forward.1} parent=5 // pred_check_branch
      %226 = sbr.rel (%p223) target = $region12
    $region11: #{modified_wav2vec2_ser_forward.1} parent=5 // pred_region
      %s227 = ssub.s32 %s14, 1
      // Predicated region
      $region13: #{modified_wav2vec2_ser_forward.1} parent=11 // pred_check
        %p228 = pneg %p61
      $region14: #{modified_wav2vec2_ser_forward.1} parent=11 // pred_check_branch
        %230 = sbr.rel (%p228) target = $region16
      $region15: #{modified_wav2vec2_ser_forward.1} parent=11 // pred_region
        _
      $region16: #{modified_wav2vec2_ser_forward.1} parent=11 // pred_fallthru
        _
      // Predicated region
      $region17: #{modified_wav2vec2_ser_forward.1} parent=11 // pred_check
        %p231 = pneg %p82
      $region18: #{modified_wav2vec2_ser_forward.1} parent=11 // pred_check_branch
        %233 = sbr.rel (%p231) target = $region20
      $region19: #{modified_wav2vec2_ser_forward.1} parent=11 // pred_region
        _
      $region20: #{modified_wav2vec2_ser_forward.1} parent=11 // pred_fallthru
        _
      // Predicated region
      $region21: #{modified_wav2vec2_ser_forward.1} parent=11 // pred_check
        %p234 = pneg %p103
      $region22: #{modified_wav2vec2_ser_forward.1} parent=11 // pred_check_branch
        %236 = sbr.rel (%p234) target = $region24
      $region23: #{modified_wav2vec2_ser_forward.1} parent=11 // pred_region
        _
      $region24: #{modified_wav2vec2_ser_forward.1} parent=11 // pred_fallthru
        _
      // Predicated region
      $region25: #{modified_wav2vec2_ser_forward.1} parent=11 // pred_check
        %p237 = pneg %p124
      $region26: #{modified_wav2vec2_ser_forward.1} parent=11 // pred_check_branch
        %239 = sbr.rel (%p237) target = $region28
      $region27: #{modified_wav2vec2_ser_forward.1} parent=11 // pred_region
        _
      $region28: #{modified_wav2vec2_ser_forward.1} parent=11 // pred_fallthru
        _
      // Predicated region
      $region29: #{modified_wav2vec2_ser_forward.1} parent=11 // pred_check
        %p240 = pneg %p145
      $region30: #{modified_wav2vec2_ser_forward.1} parent=11 // pred_check_branch
        %242 = sbr.rel (%p240) target = $region32
      $region31: #{modified_wav2vec2_ser_forward.1} parent=11 // pred_region
        _
      $region32: #{modified_wav2vec2_ser_forward.1} parent=11 // pred_fallthru
        _
      // Predicated region
      $region33: #{modified_wav2vec2_ser_forward.1} parent=11 // pred_check
        %p243 = pneg %p166
      $region34: #{modified_wav2vec2_ser_forward.1} parent=11 // pred_check_branch
        %245 = sbr.rel (%p243) target = $region36
      $region35: #{modified_wav2vec2_ser_forward.1} parent=11 // pred_region
        _
      $region36: #{modified_wav2vec2_ser_forward.1} parent=11 // pred_fallthru
        _
      // Predicated region
      $region37: #{modified_wav2vec2_ser_forward.1} parent=11 // pred_check
        %p246 = pneg %p187
      $region38: #{modified_wav2vec2_ser_forward.1} parent=11 // pred_check_branch
        %248 = sbr.rel (%p246) target = $region40
      $region39: #{modified_wav2vec2_ser_forward.1} parent=11 // pred_region
        _
      $region40: #{modified_wav2vec2_ser_forward.1} parent=11 // pred_fallthru
        _
    $region12: #{modified_wav2vec2_ser_forward.1} parent=5 // pred_fallthru
      _
    %p249 = scmp.lt.s32.totalorder %s14, 2
    // Predicated region
    $region41: #{modified_wav2vec2_ser_forward.1} parent=5 // pred_check
      %p250 = pneg %p249
    $region42: #{modified_wav2vec2_ser_forward.1} parent=5 // pred_check_branch
      %252 = sbr.rel (%p250) target = $region44
    $region43: #{modified_wav2vec2_ser_forward.1} parent=5 // pred_region
      // Predicated region
      $region45: #{modified_wav2vec2_ser_forward.1} parent=43 // pred_check
        %p253 = pneg %p34
      $region46: #{modified_wav2vec2_ser_forward.1} parent=43 // pred_check_branch
        %255 = sbr.rel (%p253) target = $region48
      $region47: #{modified_wav2vec2_ser_forward.1} parent=43 // pred_region
        %s256 = smul.u32 16, %s14
        %p257 = scmp.lt.s32.totalorder %s256, 31
        %s258 = scalar_select %p257, %s256, 31
        %s259 = smul.addr %s258, 8
        %s260 = scalar_lea.vmem %s0, %s259
        %s261 = smul.u32 16, %s14
      $region48: #{modified_wav2vec2_ser_forward.1} parent=43 // pred_fallthru
        _
    $region44: #{modified_wav2vec2_ser_forward.1} parent=5 // pred_fallthru
      _
    %p262 = scmp.le.s32.totalorder 1, %s14
    %p263 = scmp.lt.s32.totalorder %s14, 3
    %p264 = pnand %p262, %p263
    %p265 = pneg %p264
    // Predicated region
    $region49: #{modified_wav2vec2_ser_forward.1} parent=5 // pred_check
      _
    $region50: #{modified_wav2vec2_ser_forward.1} parent=5 // pred_check_branch
      %267 = sbr.rel (%p264) target = $region52
    $region51: #{modified_wav2vec2_ser_forward.1} parent=5 // pred_region
      %s268 = ssub.s32 %s14, 1
      %s269 = smul.u32 16, %s19
      %p270 = scmp.lt.s32.totalorder %s269, 31
      %s271 = scalar_select %p270, %s269, 31
      %s272 = smul.addr %s271, 8
      %s273 = scalar_lea.vmem %s0, %s272
      %p274 = pneg %p40
      %p275 = pneg %p37
      %p276 = pneg %p61
      %p277 = pneg %p58
      %p278 = pneg %p82
      %p279 = pneg %p79
      %p280 = pneg %p103
      %p281 = pneg %p100
      %p282 = pneg %p124
      %p283 = pneg %p121
      %p284 = pneg %p145
      %p285 = pneg %p142
      %p286 = pneg %p166
      %p287 = pneg %p163
      %p288 = pneg %p187
      %p289 = pneg %p184
      %p290 = pneg %p213
      %p291 = pneg %p210
      %p292 = scmp.lt.s32.totalorder %s19, 1
      %s293 = scalar_select %p292, %s19, 1
      %s294 = smul.addr %s293, 8
      %s295 = scalar_lea.vmem %s8, %s294
      %s296 = smul.u32 16, %s19
      %p297 = scmp.lt.s32.totalorder %s296, 31
      %s298 = scalar_select %p297, %s296, 31
      %s299 = smul.addr %s298, 8
      %s300 = scalar_lea.vmem %s0, %s299
      %s301 = smul.u32 16, %s19
      %p302 = scmp.lt.s32.totalorder %s19, 1
      %s303 = scalar_select %p302, %s19, 1
      %s304 = smul.addr %s303, 8
      %s305 = scalar_lea.vmem %s8, %s304
      %v306 = vld [vmem:[%s300] sm:$0xff]
      %v307 = vld [vmem:[%s300 + $0x8] sm:$0xff]
      %v308 = vld [vmem:[%s300 + $0x10] sm:$0xff]
      %v309 = vld [vmem:[%s300 + $0x18] sm:$0xff]
      %v310 = vld [vmem:[%s300 + $0x20] sm:$0xff]
      %v311 = vld [vmem:[%s300 + $0x28] sm:$0xff]
      %v312 = vld [vmem:[%s300 + $0x30] sm:$0xff]
      %v313 = vld [vmem:[%s300 + $0x38] sm:$0xff]
      %v314 = vld [vmem:[%s300 + $0x40] sm:$0xff]
      %v315 = vld [vmem:[%s300 + $0x48] sm:$0xff]
      %v316 = vld [vmem:[%s300 + $0x50] sm:$0xff]
      %v317 = vld [vmem:[%s300 + $0x58] sm:$0xff]
      %v318 = vld [vmem:[%s300 + $0x60] sm:$0xff]
      %v319 = vld [vmem:[%s300 + $0x68] sm:$0xff]
      %v320 = vld [vmem:[%s300 + $0x70] sm:$0xff]
      %v321 = vld [vmem:[%s300 + $0x78] sm:$0xff]
      %v322 = vld [vmem:[%s2] sm:$0xff]
      %v323 = vld [vmem:[%s2 + $0x8] sm:$0xff]
      %v324 = vld [vmem:[%s3] sm:$0x1]
      %v326 = vperm.slane %v324, 0
      %vm328 = vcmask 130048
      %v330 = vsel %vm328, %v306, 0
      %v333 = vsel %vm328, %v307, 0
      %v336 = vsel %vm328, %v308, 0
      %v339 = vsel %vm328, %v309, 0
      %v342 = vsel %vm328, %v310, 0
      %v345 = vsel %vm328, %v311, 0
      %v348 = vsel %vm328, %v312, 0
      %v351 = vsel %vm328, %v313, 0
      %v354 = vsel %vm328, %v314, 0
      %v357 = vsel %vm328, %v315, 0
      %v360 = vsel %vm328, %v316, 0
      %v363 = vsel %vm328, %v317, 0
      %v366 = vsel %vm328, %v318, 0
      %v369 = vsel %vm328, %v319, 0
      %v372 = vsel %vm328, %v320, 0
      %v375 = vsel %vm328, %v321, 0
      %377 = vmatpush.msra.mxu0 0.0
      %378 = vmatpush.msra.mxu0 0.0
      %379 = vmatpush.msra.mxu0 0.0
      %380 = vmatpush.msra.mxu0 0.0
      %381 = vmatpush.msra.mxu0 0.0
      %382 = vmatpush.msra.mxu0 0.0
      %383 = vmatpush.msra.mxu0 0.0
      %384 = vmatpush.msra.mxu0 0.0
      %385 = vmatpush.msra.mxu0 0.0
      %386 = vmatpush.msra.mxu0 0.0
      %387 = vmatpush.msra.mxu0 0.0
      %388 = vmatpush.msra.mxu0 0.0
      %389 = vmatpush.msra.mxu0 0.0
      %390 = vmatpush.msra.mxu0 0.0
      %391 = vmatpush.msra.mxu0 %v323
      %392 = vmatpush.msra.mxu0 %v322
      %393 = vmatmul.f32.gmra.mxu0 %v330
      %v394 = vpop.f32.mrf.mxu0
      %v395 = vadd.f32 %v326, %v394
      %396 = vmatmul.f32.gmra.mxu0 %v333
      %v397 = vpop.f32.mrf.mxu0
      %v398 = vadd.f32 %v326, %v397
      %399 = vmatmul.f32.gmra.mxu0 %v336
      %v400 = vpop.f32.mrf.mxu0
      %v401 = vadd.f32 %v326, %v400
      %402 = vmatmul.f32.gmra.mxu0 %v339
      %v403 = vpop.f32.mrf.mxu0
      %v404 = vadd.f32 %v326, %v403
      %405 = vmatmul.f32.gmra.mxu0 %v342
      %v406 = vpop.f32.mrf.mxu0
      %v407 = vadd.f32 %v326, %v406
      %408 = vmatmul.f32.gmra.mxu0 %v345
      %v409 = vpop.f32.mrf.mxu0
      %v410 = vadd.f32 %v326, %v409
      %411 = vmatmul.f32.gmra.mxu0 %v348
      %v412 = vpop.f32.mrf.mxu0
      %v413 = vadd.f32 %v326, %v412
      %414 = vmatmul.f32.gmra.mxu0 %v351
      %v415 = vpop.f32.mrf.mxu0
      %v416 = vadd.f32 %v326, %v415
      %417 = vmatmul.f32.gmra.mxu0 %v354
      %v418 = vpop.f32.mrf.mxu0
      %v419 = vadd.f32 %v326, %v418
      %420 = vmatmul.f32.gmra.mxu0 %v357
      %v421 = vpop.f32.mrf.mxu0
      %v422 = vadd.f32 %v326, %v421
      %423 = vmatmul.f32.gmra.mxu0 %v360
      %v424 = vpop.f32.mrf.mxu0
      %v425 = vadd.f32 %v326, %v424
      %426 = vmatmul.f32.gmra.mxu0 %v363
      %v427 = vpop.f32.mrf.mxu0
      %v428 = vadd.f32 %v326, %v427
      %429 = vmatmul.f32.gmra.mxu0 %v366
      %v430 = vpop.f32.mrf.mxu0
      %v431 = vadd.f32 %v326, %v430
      %432 = vmatmul.f32.gmra.mxu0 %v369
      %v433 = vpop.f32.mrf.mxu0
      %v434 = vadd.f32 %v326, %v433
      %435 = vmatmul.f32.gmra.mxu0 %v372
      %v436 = vpop.f32.mrf.mxu0
      %v437 = vadd.f32 %v326, %v436
      %438 = vmatmul.f32.gmra.mxu0 %v375
      %v439 = vpop.f32.mrf.mxu0
      %v440 = vadd.f32 %v326, %v439
      %441 = vdwg.mxu0
      %v442 = vmul.f32 %v395, %v395
      %v443 = vmul.f32 %v398, %v398
      %v444 = vmul.f32 %v401, %v401
      %v445 = vmul.f32 %v404, %v404
      %v446 = vmul.f32 %v407, %v407
      %v447 = vmul.f32 %v410, %v410
      %v448 = vmul.f32 %v413, %v413
      %v449 = vmul.f32 %v416, %v416
      %v450 = vmul.f32 %v419, %v419
      %v451 = vmul.f32 %v422, %v422
      %v452 = vmul.f32 %v425, %v425
      %v453 = vmul.f32 %v428, %v428
      %v454 = vmul.f32 %v431, %v431
      %v455 = vmul.f32 %v434, %v434
      %v456 = vmul.f32 %v437, %v437
      %v457 = vmul.f32 %v440, %v440
      %v458 = vmul.f32 %v395, %v442
      %v459 = vmul.f32 %v398, %v443
      %v460 = vmul.f32 %v401, %v444
      %v461 = vmul.f32 %v404, %v445
      %v462 = vmul.f32 %v407, %v446
      %v463 = vmul.f32 %v410, %v447
      %v464 = vmul.f32 %v413, %v448
      %v465 = vmul.f32 %v416, %v449
      %v466 = vmul.f32 %v419, %v450
      %v467 = vmul.f32 %v422, %v451
      %v468 = vmul.f32 %v425, %v452
      %v469 = vmul.f32 %v428, %v453
      %v470 = vmul.f32 %v431, %v454
      %v471 = vmul.f32 %v434, %v455
      %v472 = vmul.f32 %v437, %v456
      %v473 = vmul.f32 %v440, %v457
      %v474 = vmul.f32 %v458, 0.044715
      %v475 = vmul.f32 %v459, 0.044715
      %v476 = vmul.f32 %v460, 0.044715
      %v477 = vmul.f32 %v461, 0.044715
      %v478 = vmul.f32 %v462, 0.044715
      %v479 = vmul.f32 %v463, 0.044715
      %v480 = vmul.f32 %v464, 0.044715
      %v481 = vmul.f32 %v465, 0.044715
      %v482 = vmul.f32 %v466, 0.044715
      %v483 = vmul.f32 %v467, 0.044715
      %v484 = vmul.f32 %v468, 0.044715
      %v485 = vmul.f32 %v469, 0.044715
      %v486 = vmul.f32 %v470, 0.044715
      %v487 = vmul.f32 %v471, 0.044715
      %v488 = vmul.f32 %v472, 0.044715
      %v489 = vmul.f32 %v473, 0.044715
      %v490 = vadd.f32 %v395, %v474
      %v491 = vadd.f32 %v398, %v475
      %v492 = vadd.f32 %v401, %v476
      %v493 = vadd.f32 %v404, %v477
      %v494 = vadd.f32 %v407, %v478
      %v495 = vadd.f32 %v410, %v479
      %v496 = vadd.f32 %v413, %v480
      %v497 = vadd.f32 %v416, %v481
      %v498 = vadd.f32 %v419, %v482
      %v499 = vadd.f32 %v422, %v483
      %v500 = vadd.f32 %v425, %v484
      %v501 = vadd.f32 %v428, %v485
      %v502 = vadd.f32 %v431, %v486
      %v503 = vadd.f32 %v434, %v487
      %v504 = vadd.f32 %v437, %v488
      %v505 = vadd.f32 %v440, %v489
      %v506 = vmul.f32 %v490, 0.7978846
      %v507 = vmul.f32 %v491, 0.7978846
      %v508 = vmul.f32 %v492, 0.7978846
      %v509 = vmul.f32 %v493, 0.7978846
      %v510 = vmul.f32 %v494, 0.7978846
      %v511 = vmul.f32 %v495, 0.7978846
      %v512 = vmul.f32 %v496, 0.7978846
      %v513 = vmul.f32 %v497, 0.7978846
      %v514 = vmul.f32 %v498, 0.7978846
      %v515 = vmul.f32 %v499, 0.7978846
      %v516 = vmul.f32 %v500, 0.7978846
      %v517 = vmul.f32 %v501, 0.7978846
      %v518 = vmul.f32 %v502, 0.7978846
      %v519 = vmul.f32 %v503, 0.7978846
      %v520 = vmul.f32 %v504, 0.7978846
      %v521 = vmul.f32 %v505, 0.7978846
      %v522 = vtanh.pop %v506
      %v523 = vtanh.pop %v507
      %v524 = vtanh.pop %v508
      %v525 = vtanh.pop %v509
      %v526 = vtanh.pop %v510
      %v527 = vtanh.pop %v511
      %v528 = vtanh.pop %v512
      %v529 = vtanh.pop %v513
      %v530 = vtanh.pop %v514
      %v531 = vtanh.pop %v515
      %v532 = vtanh.pop %v516
      %v533 = vtanh.pop %v517
      %v534 = vtanh.pop %v518
      %v535 = vtanh.pop %v519
      %v536 = vtanh.pop %v520
      %v537 = vtanh.pop %v521
      %v538 = vadd.f32 %v522, 1.0
      %v539 = vadd.f32 %v523, 1.0
      %v540 = vadd.f32 %v524, 1.0
      %v541 = vadd.f32 %v525, 1.0
      %v542 = vadd.f32 %v526, 1.0
      %v543 = vadd.f32 %v527, 1.0
      %v544 = vadd.f32 %v528, 1.0
      %v545 = vadd.f32 %v529, 1.0
      %v546 = vadd.f32 %v530, 1.0
      %v547 = vadd.f32 %v531, 1.0
      %v548 = vadd.f32 %v532, 1.0
      %v549 = vadd.f32 %v533, 1.0
      %v550 = vadd.f32 %v534, 1.0
      %v551 = vadd.f32 %v535, 1.0
      %v552 = vadd.f32 %v536, 1.0
      %v553 = vadd.f32 %v537, 1.0
      %v554 = vmul.f32 %v538, 0.5
      %v555 = vmul.f32 %v539, 0.5
      %v556 = vmul.f32 %v540, 0.5
      %v557 = vmul.f32 %v541, 0.5
      %v558 = vmul.f32 %v542, 0.5
      %v559 = vmul.f32 %v543, 0.5
      %v560 = vmul.f32 %v544, 0.5
      %v561 = vmul.f32 %v545, 0.5
      %v562 = vmul.f32 %v546, 0.5
      %v563 = vmul.f32 %v547, 0.5
      %v564 = vmul.f32 %v548, 0.5
      %v565 = vmul.f32 %v549, 0.5
      %v566 = vmul.f32 %v550, 0.5
      %v567 = vmul.f32 %v551, 0.5
      %v568 = vmul.f32 %v552, 0.5
      %v569 = vmul.f32 %v553, 0.5
      %v570 = vmul.f32 %v395, %v554
      %v571 = vmul.f32 %v398, %v555
      %v572 = vmul.f32 %v401, %v556
      %v573 = vmul.f32 %v404, %v557
      %v574 = vmul.f32 %v407, %v558
      %v575 = vmul.f32 %v410, %v559
      %v576 = vmul.f32 %v413, %v560
      %v577 = vmul.f32 %v416, %v561
      %v578 = vmul.f32 %v419, %v562
      %v579 = vmul.f32 %v422, %v563
      %v580 = vmul.f32 %v425, %v564
      %v581 = vmul.f32 %v428, %v565
      %v582 = vmul.f32 %v431, %v566
      %v583 = vmul.f32 %v434, %v567
      %v584 = vmul.f32 %v437, %v568
      %v585 = vmul.f32 %v440, %v569
      %v586 = vld [vmem:[%s4] sm:$0xff]
      %v587 = vld [vmem:[%s4 + $0x8] sm:$0xff]
      %v588 = vld [vmem:[%s4 + $0x10] sm:$0xff]
      %v589 = vld [vmem:[%s4 + $0x18] sm:$0xff]
      %v590 = vld [vmem:[%s4 + $0x20] sm:$0xff]
      %v591 = vld [vmem:[%s4 + $0x28] sm:$0xff]
      %v592 = vld [vmem:[%s4 + $0x30] sm:$0xff]
      %v593 = vld [vmem:[%s4 + $0x38] sm:$0xff]
      %v594 = vld [vmem:[%s4 + $0x40] sm:$0xff]
      %v595 = vld [vmem:[%s4 + $0x48] sm:$0xff]
      %v596 = vld [vmem:[%s4 + $0x50] sm:$0xff]
      %v597 = vld [vmem:[%s4 + $0x58] sm:$0xff]
      %v598 = vld [vmem:[%s4 + $0x60] sm:$0xff]
      %v599 = vld [vmem:[%s4 + $0x68] sm:$0xff]
      %v600 = vld [vmem:[%s4 + $0x70] sm:$0xff]
      %v601 = vld [vmem:[%s4 + $0x78] sm:$0xff]
      %v602 = vld [vmem:[%s5] sm:$0x1]
      %v604 = vperm.slane %v602, 0
      %606 = vmatpush.msra.mxu0 %v601
      %607 = vmatpush.msra.mxu0 %v600
      %608 = vmatpush.msra.mxu0 %v599
      %609 = vmatpush.msra.mxu0 %v598
      %610 = vmatpush.msra.mxu0 %v597
      %611 = vmatpush.msra.mxu0 %v596
      %612 = vmatpush.msra.mxu0 %v595
      %613 = vmatpush.msra.mxu0 %v594
      %614 = vmatpush.msra.mxu0 %v593
      %615 = vmatpush.msra.mxu0 %v592
      %616 = vmatpush.msra.mxu0 %v591
      %617 = vmatpush.msra.mxu0 %v590
      %618 = vmatpush.msra.mxu0 %v589
      %619 = vmatpush.msra.mxu0 %v588
      %620 = vmatpush.msra.mxu0 %v587
      %621 = vmatpush.msra.mxu0 %v586
      %622 = vmatmul.f32.gmra.mxu0 %v570
      %v623 = vpop.f32.mrf.mxu0
      %v624 = vadd.f32 %v604, %v623
      %625 = vmatmul.f32.gmra.mxu0 %v571
      %v626 = vpop.f32.mrf.mxu0
      %v627 = vadd.f32 %v604, %v626
      %628 = vmatmul.f32.gmra.mxu0 %v572
      %v629 = vpop.f32.mrf.mxu0
      %v630 = vadd.f32 %v604, %v629
      %631 = vmatmul.f32.gmra.mxu0 %v573
      %v632 = vpop.f32.mrf.mxu0
      %v633 = vadd.f32 %v604, %v632
      %634 = vmatmul.f32.gmra.mxu0 %v574
      %v635 = vpop.f32.mrf.mxu0
      %v636 = vadd.f32 %v604, %v635
      %637 = vmatmul.f32.gmra.mxu0 %v575
      %v638 = vpop.f32.mrf.mxu0
      %v639 = vadd.f32 %v604, %v638
      %640 = vmatmul.f32.gmra.mxu0 %v576
      %v641 = vpop.f32.mrf.mxu0
      %v642 = vadd.f32 %v604, %v641
      %643 = vmatmul.f32.gmra.mxu0 %v577
      %v644 = vpop.f32.mrf.mxu0
      %v645 = vadd.f32 %v604, %v644
      %646 = vmatmul.f32.gmra.mxu0 %v578
      %v647 = vpop.f32.mrf.mxu0
      %v648 = vadd.f32 %v604, %v647
      %649 = vmatmul.f32.gmra.mxu0 %v579
      %v650 = vpop.f32.mrf.mxu0
      %v651 = vadd.f32 %v604, %v650
      %652 = vmatmul.f32.gmra.mxu0 %v580
      %v653 = vpop.f32.mrf.mxu0
      %v654 = vadd.f32 %v604, %v653
      %655 = vmatmul.f32.gmra.mxu0 %v581
      %v656 = vpop.f32.mrf.mxu0
      %v657 = vadd.f32 %v604, %v656
      %658 = vmatmul.f32.gmra.mxu0 %v582
      %v659 = vpop.f32.mrf.mxu0
      %v660 = vadd.f32 %v604, %v659
      %661 = vmatmul.f32.gmra.mxu0 %v583
      %v662 = vpop.f32.mrf.mxu0
      %v663 = vadd.f32 %v604, %v662
      %664 = vmatmul.f32.gmra.mxu0 %v584
      %v665 = vpop.f32.mrf.mxu0
      %v666 = vadd.f32 %v604, %v665
      %667 = vmatmul.f32.gmra.mxu0 %v585
      %v668 = vpop.f32.mrf.mxu0
      %v669 = vadd.f32 %v604, %v668
      %670 = vdwg.mxu0
      %v671 = vmul.f32 %v624, %v624
      %v672 = vmul.f32 %v627, %v627
      %v673 = vmul.f32 %v630, %v630
      %v674 = vmul.f32 %v633, %v633
      %v675 = vmul.f32 %v636, %v636
      %v676 = vmul.f32 %v639, %v639
      %v677 = vmul.f32 %v642, %v642
      %v678 = vmul.f32 %v645, %v645
      %v679 = vmul.f32 %v648, %v648
      %v680 = vmul.f32 %v651, %v651
      %v681 = vmul.f32 %v654, %v654
      %v682 = vmul.f32 %v657, %v657
      %v683 = vmul.f32 %v660, %v660
      %v684 = vmul.f32 %v663, %v663
      %v685 = vmul.f32 %v666, %v666
      %v686 = vmul.f32 %v669, %v669
      %v687 = vmul.f32 %v624, %v671
      %v688 = vmul.f32 %v627, %v672
      %v689 = vmul.f32 %v630, %v673
      %v690 = vmul.f32 %v633, %v674
      %v691 = vmul.f32 %v636, %v675
      %v692 = vmul.f32 %v639, %v676
      %v693 = vmul.f32 %v642, %v677
      %v694 = vmul.f32 %v645, %v678
      %v695 = vmul.f32 %v648, %v679
      %v696 = vmul.f32 %v651, %v680
      %v697 = vmul.f32 %v654, %v681
      %v698 = vmul.f32 %v657, %v682
      %v699 = vmul.f32 %v660, %v683
      %v700 = vmul.f32 %v663, %v684
      %v701 = vmul.f32 %v666, %v685
      %v702 = vmul.f32 %v669, %v686
      %v703 = vmul.f32 %v687, 0.044715
      %v704 = vmul.f32 %v688, 0.044715
      %v705 = vmul.f32 %v689, 0.044715
      %v706 = vmul.f32 %v690, 0.044715
      %v707 = vmul.f32 %v691, 0.044715
      %v708 = vmul.f32 %v692, 0.044715
      %v709 = vmul.f32 %v693, 0.044715
      %v710 = vmul.f32 %v694, 0.044715
      %v711 = vmul.f32 %v695, 0.044715
      %v712 = vmul.f32 %v696, 0.044715
      %v713 = vmul.f32 %v697, 0.044715
      %v714 = vmul.f32 %v698, 0.044715
      %v715 = vmul.f32 %v699, 0.044715
      %v716 = vmul.f32 %v700, 0.044715
      %v717 = vmul.f32 %v701, 0.044715
      %v718 = vmul.f32 %v702, 0.044715
      %v719 = vadd.f32 %v624, %v703
      %v720 = vadd.f32 %v627, %v704
      %v721 = vadd.f32 %v630, %v705
      %v722 = vadd.f32 %v633, %v706
      %v723 = vadd.f32 %v636, %v707
      %v724 = vadd.f32 %v639, %v708
      %v725 = vadd.f32 %v642, %v709
      %v726 = vadd.f32 %v645, %v710
      %v727 = vadd.f32 %v648, %v711
      %v728 = vadd.f32 %v651, %v712
      %v729 = vadd.f32 %v654, %v713
      %v730 = vadd.f32 %v657, %v714
      %v731 = vadd.f32 %v660, %v715
      %v732 = vadd.f32 %v663, %v716
      %v733 = vadd.f32 %v666, %v717
      %v734 = vadd.f32 %v669, %v718
      %v735 = vmul.f32 %v719, 0.7978846
      %v736 = vmul.f32 %v720, 0.7978846
      %v737 = vmul.f32 %v721, 0.7978846
      %v738 = vmul.f32 %v722, 0.7978846
      %v739 = vmul.f32 %v723, 0.7978846
      %v740 = vmul.f32 %v724, 0.7978846
      %v741 = vmul.f32 %v725, 0.7978846
      %v742 = vmul.f32 %v726, 0.7978846
      %v743 = vmul.f32 %v727, 0.7978846
      %v744 = vmul.f32 %v728, 0.7978846
      %v745 = vmul.f32 %v729, 0.7978846
      %v746 = vmul.f32 %v730, 0.7978846
      %v747 = vmul.f32 %v731, 0.7978846
      %v748 = vmul.f32 %v732, 0.7978846
      %v749 = vmul.f32 %v733, 0.7978846
      %v750 = vmul.f32 %v734, 0.7978846
      %v751 = vtanh.pop %v735
      %v752 = vtanh.pop %v736
      %v753 = vtanh.pop %v737
      %v754 = vtanh.pop %v738
      %v755 = vtanh.pop %v739
      %v756 = vtanh.pop %v740
      %v757 = vtanh.pop %v741
      %v758 = vtanh.pop %v742
      %v759 = vtanh.pop %v743
      %v760 = vtanh.pop %v744
      %v761 = vtanh.pop %v745
      %v762 = vtanh.pop %v746
      %v763 = vtanh.pop %v747
      %v764 = vtanh.pop %v748
      %v765 = vtanh.pop %v749
      %v766 = vtanh.pop %v750
      %v767 = vadd.f32 %v751, 1.0
      %v768 = vadd.f32 %v752, 1.0
      %v769 = vadd.f32 %v753, 1.0
      %v770 = vadd.f32 %v754, 1.0
      %v771 = vadd.f32 %v755, 1.0
      %v772 = vadd.f32 %v756, 1.0
      %v773 = vadd.f32 %v757, 1.0
      %v774 = vadd.f32 %v758, 1.0
      %v775 = vadd.f32 %v759, 1.0
      %v776 = vadd.f32 %v760, 1.0
      %v777 = vadd.f32 %v761, 1.0
      %v778 = vadd.f32 %v762, 1.0
      %v779 = vadd.f32 %v763, 1.0
      %v780 = vadd.f32 %v764, 1.0
      %v781 = vadd.f32 %v765, 1.0
      %v782 = vadd.f32 %v766, 1.0
      %v783 = vmul.f32 %v767, 0.5
      %v784 = vmul.f32 %v768, 0.5
      %v785 = vmul.f32 %v769, 0.5
      %v786 = vmul.f32 %v770, 0.5
      %v787 = vmul.f32 %v771, 0.5
      %v788 = vmul.f32 %v772, 0.5
      %v789 = vmul.f32 %v773, 0.5
      %v790 = vmul.f32 %v774, 0.5
      %v791 = vmul.f32 %v775, 0.5
      %v792 = vmul.f32 %v776, 0.5
      %v793 = vmul.f32 %v777, 0.5
      %v794 = vmul.f32 %v778, 0.5
      %v795 = vmul.f32 %v779, 0.5
      %v796 = vmul.f32 %v780, 0.5
      %v797 = vmul.f32 %v781, 0.5
      %v798 = vmul.f32 %v782, 0.5
      %v799 = vmul.f32 %v624, %v783
      %v800 = vmul.f32 %v627, %v784
      %v801 = vmul.f32 %v630, %v785
      %v802 = vmul.f32 %v633, %v786
      %v803 = vmul.f32 %v636, %v787
      %v804 = vmul.f32 %v639, %v788
      %v805 = vmul.f32 %v642, %v789
      %v806 = vmul.f32 %v645, %v790
      %v807 = vmul.f32 %v648, %v791
      %v808 = vmul.f32 %v651, %v792
      %v809 = vmul.f32 %v654, %v793
      %v810 = vmul.f32 %v657, %v794
      %v811 = vmul.f32 %v660, %v795
      %v812 = vmul.f32 %v663, %v796
      %v813 = vmul.f32 %v666, %v797
      %v814 = vmul.f32 %v669, %v798
      %v815 = vadd.f32 %v799, %v570
      %v816 = vadd.f32 %v800, %v571
      %v817 = vadd.f32 %v801, %v572
      %v818 = vadd.f32 %v802, %v573
      %v819 = vadd.f32 %v803, %v574
      %v820 = vadd.f32 %v804, %v575
      %v821 = vadd.f32 %v805, %v576
      %v822 = vadd.f32 %v806, %v577
      %v823 = vadd.f32 %v807, %v578
      %v824 = vadd.f32 %v808, %v579
      %v825 = vadd.f32 %v809, %v580
      %v826 = vadd.f32 %v810, %v581
      %v827 = vadd.f32 %v811, %v582
      %v828 = vadd.f32 %v812, %v583
      %v829 = vadd.f32 %v813, %v584
      %v830 = vadd.f32 %v814, %v585
      %s831 = scalar_lea.vmem %s4, 128
      %v832 = vld [vmem:[%s831] sm:$0xff]
      %v833 = vld [vmem:[%s831 + $0x8] sm:$0xff]
      %v834 = vld [vmem:[%s831 + $0x10] sm:$0xff]
      %v835 = vld [vmem:[%s831 + $0x18] sm:$0xff]
      %v836 = vld [vmem:[%s831 + $0x20] sm:$0xff]
      %v837 = vld [vmem:[%s831 + $0x28] sm:$0xff]
      %v838 = vld [vmem:[%s831 + $0x30] sm:$0xff]
      %v839 = vld [vmem:[%s831 + $0x38] sm:$0xff]
      %v840 = vld [vmem:[%s831 + $0x40] sm:$0xff]
      %v841 = vld [vmem:[%s831 + $0x48] sm:$0xff]
      %v842 = vld [vmem:[%s831 + $0x50] sm:$0xff]
      %v843 = vld [vmem:[%s831 + $0x58] sm:$0xff]
      %v844 = vld [vmem:[%s831 + $0x60] sm:$0xff]
      %v845 = vld [vmem:[%s831 + $0x68] sm:$0xff]
      %v846 = vld [vmem:[%s831 + $0x70] sm:$0xff]
      %v847 = vld [vmem:[%s831 + $0x78] sm:$0xff]
      %s848 = scalar_lea.vmem %s5, 1
      %v849 = vld [vmem:[%s848] sm:$0x1]
      %v851 = vperm.slane %v849, 0
      %853 = vmatpush.msra.mxu0 %v847
      %854 = vmatpush.msra.mxu0 %v846
      %855 = vmatpush.msra.mxu0 %v845
      %856 = vmatpush.msra.mxu0 %v844
      %857 = vmatpush.msra.mxu0 %v843
      %858 = vmatpush.msra.mxu0 %v842
      %859 = vmatpush.msra.mxu0 %v841
      %860 = vmatpush.msra.mxu0 %v840
      %861 = vmatpush.msra.mxu0 %v839
      %862 = vmatpush.msra.mxu0 %v838
      %863 = vmatpush.msra.mxu0 %v837
      %864 = vmatpush.msra.mxu0 %v836
      %865 = vmatpush.msra.mxu0 %v835
      %866 = vmatpush.msra.mxu0 %v834
      %867 = vmatpush.msra.mxu0 %v833
      %868 = vmatpush.msra.mxu0 %v832
      %869 = vmatmul.f32.gmra.mxu0 %v815
      %v870 = vpop.f32.mrf.mxu0
      %v871 = vadd.f32 %v851, %v870
      %872 = vmatmul.f32.gmra.mxu0 %v816
      %v873 = vpop.f32.mrf.mxu0
      %v874 = vadd.f32 %v851, %v873
      %875 = vmatmul.f32.gmra.mxu0 %v817
      %v876 = vpop.f32.mrf.mxu0
      %v877 = vadd.f32 %v851, %v876
      %878 = vmatmul.f32.gmra.mxu0 %v818
      %v879 = vpop.f32.mrf.mxu0
      %v880 = vadd.f32 %v851, %v879
      %881 = vmatmul.f32.gmra.mxu0 %v819
      %v882 = vpop.f32.mrf.mxu0
      %v883 = vadd.f32 %v851, %v882
      %884 = vmatmul.f32.gmra.mxu0 %v820
      %v885 = vpop.f32.mrf.mxu0
      %v886 = vadd.f32 %v851, %v885
      %887 = vmatmul.f32.gmra.mxu0 %v821
      %v888 = vpop.f32.mrf.mxu0
      %v889 = vadd.f32 %v851, %v888
      %890 = vmatmul.f32.gmra.mxu0 %v822
      %v891 = vpop.f32.mrf.mxu0
      %v892 = vadd.f32 %v851, %v891
      %893 = vmatmul.f32.gmra.mxu0 %v823
      %v894 = vpop.f32.mrf.mxu0
      %v895 = vadd.f32 %v851, %v894
      %896 = vmatmul.f32.gmra.mxu0 %v824
      %v897 = vpop.f32.mrf.mxu0
      %v898 = vadd.f32 %v851, %v897
      %899 = vmatmul.f32.gmra.mxu0 %v825
      %v900 = vpop.f32.mrf.mxu0
      %v901 = vadd.f32 %v851, %v900
      %902 = vmatmul.f32.gmra.mxu0 %v826
      %v903 = vpop.f32.mrf.mxu0
      %v904 = vadd.f32 %v851, %v903
      %905 = vmatmul.f32.gmra.mxu0 %v827
      %v906 = vpop.f32.mrf.mxu0
      %v907 = vadd.f32 %v851, %v906
      %908 = vmatmul.f32.gmra.mxu0 %v828
      %v909 = vpop.f32.mrf.mxu0
      %v910 = vadd.f32 %v851, %v909
      %911 = vmatmul.f32.gmra.mxu0 %v829
      %v912 = vpop.f32.mrf.mxu0
      %v913 = vadd.f32 %v851, %v912
      %914 = vmatmul.f32.gmra.mxu0 %v830
      %v915 = vpop.f32.mrf.mxu0
      %v916 = vadd.f32 %v851, %v915
      %917 = vdwg.mxu0
      %v918 = vmul.f32 %v871, %v871
      %v919 = vmul.f32 %v874, %v874
      %v920 = vmul.f32 %v877, %v877
      %v921 = vmul.f32 %v880, %v880
      %v922 = vmul.f32 %v883, %v883
      %v923 = vmul.f32 %v886, %v886
      %v924 = vmul.f32 %v889, %v889
      %v925 = vmul.f32 %v892, %v892
      %v926 = vmul.f32 %v895, %v895
      %v927 = vmul.f32 %v898, %v898
      %v928 = vmul.f32 %v901, %v901
      %v929 = vmul.f32 %v904, %v904
      %v930 = vmul.f32 %v907, %v907
      %v931 = vmul.f32 %v910, %v910
      %v932 = vmul.f32 %v913, %v913
      %v933 = vmul.f32 %v916, %v916
      %v934 = vmul.f32 %v871, %v918
      %v935 = vmul.f32 %v874, %v919
      %v936 = vmul.f32 %v877, %v920
      %v937 = vmul.f32 %v880, %v921
      %v938 = vmul.f32 %v883, %v922
      %v939 = vmul.f32 %v886, %v923
      %v940 = vmul.f32 %v889, %v924
      %v941 = vmul.f32 %v892, %v925
      %v942 = vmul.f32 %v895, %v926
      %v943 = vmul.f32 %v898, %v927
      %v944 = vmul.f32 %v901, %v928
      %v945 = vmul.f32 %v904, %v929
      %v946 = vmul.f32 %v907, %v930
      %v947 = vmul.f32 %v910, %v931
      %v948 = vmul.f32 %v913, %v932
      %v949 = vmul.f32 %v916, %v933
      %v950 = vmul.f32 %v934, 0.044715
      %v951 = vmul.f32 %v935, 0.044715
      %v952 = vmul.f32 %v936, 0.044715
      %v953 = vmul.f32 %v937, 0.044715
      %v954 = vmul.f32 %v938, 0.044715
      %v955 = vmul.f32 %v939, 0.044715
      %v956 = vmul.f32 %v940, 0.044715
      %v957 = vmul.f32 %v941, 0.044715
      %v958 = vmul.f32 %v942, 0.044715
      %v959 = vmul.f32 %v943, 0.044715
      %v960 = vmul.f32 %v944, 0.044715
      %v961 = vmul.f32 %v945, 0.044715
      %v962 = vmul.f32 %v946, 0.044715
      %v963 = vmul.f32 %v947, 0.044715
      %v964 = vmul.f32 %v948, 0.044715
      %v965 = vmul.f32 %v949, 0.044715
      %v966 = vadd.f32 %v871, %v950
      %v967 = vadd.f32 %v874, %v951
      %v968 = vadd.f32 %v877, %v952
      %v969 = vadd.f32 %v880, %v953
      %v970 = vadd.f32 %v883, %v954
      %v971 = vadd.f32 %v886, %v955
      %v972 = vadd.f32 %v889, %v956
      %v973 = vadd.f32 %v892, %v957
      %v974 = vadd.f32 %v895, %v958
      %v975 = vadd.f32 %v898, %v959
      %v976 = vadd.f32 %v901, %v960
      %v977 = vadd.f32 %v904, %v961
      %v978 = vadd.f32 %v907, %v962
      %v979 = vadd.f32 %v910, %v963
      %v980 = vadd.f32 %v913, %v964
      %v981 = vadd.f32 %v916, %v965
      %v982 = vmul.f32 %v966, 0.7978846
      %v983 = vmul.f32 %v967, 0.7978846
      %v984 = vmul.f32 %v968, 0.7978846
      %v985 = vmul.f32 %v969, 0.7978846
      %v986 = vmul.f32 %v970, 0.7978846
      %v987 = vmul.f32 %v971, 0.7978846
      %v988 = vmul.f32 %v972, 0.7978846
      %v989 = vmul.f32 %v973, 0.7978846
      %v990 = vmul.f32 %v974, 0.7978846
      %v991 = vmul.f32 %v975, 0.7978846
      %v992 = vmul.f32 %v976, 0.7978846
      %v993 = vmul.f32 %v977, 0.7978846
      %v994 = vmul.f32 %v978, 0.7978846
      %v995 = vmul.f32 %v979, 0.7978846
      %v996 = vmul.f32 %v980, 0.7978846
      %v997 = vmul.f32 %v981, 0.7978846
      %v998 = vtanh.pop %v982
      %v999 = vtanh.pop %v983
      %v1000 = vtanh.pop %v984
      %v1001 = vtanh.pop %v985
      %v1002 = vtanh.pop %v986
      %v1003 = vtanh.pop %v987
      %v1004 = vtanh.pop %v988
      %v1005 = vtanh.pop %v989
      %v1006 = vtanh.pop %v990
      %v1007 = vtanh.pop %v991
      %v1008 = vtanh.pop %v992
      %v1009 = vtanh.pop %v993
      %v1010 = vtanh.pop %v994
      %v1011 = vtanh.pop %v995
      %v1012 = vtanh.pop %v996
      %v1013 = vtanh.pop %v997
      %v1014 = vadd.f32 %v998, 1.0
      %v1015 = vadd.f32 %v999, 1.0
      %v1016 = vadd.f32 %v1000, 1.0
      %v1017 = vadd.f32 %v1001, 1.0
      %v1018 = vadd.f32 %v1002, 1.0
      %v1019 = vadd.f32 %v1003, 1.0
      %v1020 = vadd.f32 %v1004, 1.0
      %v1021 = vadd.f32 %v1005, 1.0
      %v1022 = vadd.f32 %v1006, 1.0
      %v1023 = vadd.f32 %v1007, 1.0
      %v1024 = vadd.f32 %v1008, 1.0
      %v1025 = vadd.f32 %v1009, 1.0
      %v1026 = vadd.f32 %v1010, 1.0
      %v1027 = vadd.f32 %v1011, 1.0
      %v1028 = vadd.f32 %v1012, 1.0
      %v1029 = vadd.f32 %v1013, 1.0
      %v1030 = vmul.f32 %v1014, 0.5
      %v1031 = vmul.f32 %v1015, 0.5
      %v1032 = vmul.f32 %v1016, 0.5
      %v1033 = vmul.f32 %v1017, 0.5
      %v1034 = vmul.f32 %v1018, 0.5
      %v1035 = vmul.f32 %v1019, 0.5
      %v1036 = vmul.f32 %v1020, 0.5
      %v1037 = vmul.f32 %v1021, 0.5
      %v1038 = vmul.f32 %v1022, 0.5
      %v1039 = vmul.f32 %v1023, 0.5
      %v1040 = vmul.f32 %v1024, 0.5
      %v1041 = vmul.f32 %v1025, 0.5
      %v1042 = vmul.f32 %v1026, 0.5
      %v1043 = vmul.f32 %v1027, 0.5
      %v1044 = vmul.f32 %v1028, 0.5
      %v1045 = vmul.f32 %v1029, 0.5
      %v1046 = vmul.f32 %v871, %v1030
      %v1047 = vmul.f32 %v874, %v1031
      %v1048 = vmul.f32 %v877, %v1032
      %v1049 = vmul.f32 %v880, %v1033
      %v1050 = vmul.f32 %v883, %v1034
      %v1051 = vmul.f32 %v886, %v1035
      %v1052 = vmul.f32 %v889, %v1036
      %v1053 = vmul.f32 %v892, %v1037
      %v1054 = vmul.f32 %v895, %v1038
      %v1055 = vmul.f32 %v898, %v1039
      %v1056 = vmul.f32 %v901, %v1040
      %v1057 = vmul.f32 %v904, %v1041
      %v1058 = vmul.f32 %v907, %v1042
      %v1059 = vmul.f32 %v910, %v1043
      %v1060 = vmul.f32 %v913, %v1044
      %v1061 = vmul.f32 %v916, %v1045
      %v1062 = vadd.f32 %v1046, %v815
      %v1063 = vadd.f32 %v1047, %v816
      %v1064 = vadd.f32 %v1048, %v817
      %v1065 = vadd.f32 %v1049, %v818
      %v1066 = vadd.f32 %v1050, %v819
      %v1067 = vadd.f32 %v1051, %v820
      %v1068 = vadd.f32 %v1052, %v821
      %v1069 = vadd.f32 %v1053, %v822
      %v1070 = vadd.f32 %v1054, %v823
      %v1071 = vadd.f32 %v1055, %v824
      %v1072 = vadd.f32 %v1056, %v825
      %v1073 = vadd.f32 %v1057, %v826
      %v1074 = vadd.f32 %v1058, %v827
      %v1075 = vadd.f32 %v1059, %v828
      %v1076 = vadd.f32 %v1060, %v829
      %v1077 = vadd.f32 %v1061, %v830
      %s1078 = scalar_lea.vmem %s4, 256
      %v1079 = vld [vmem:[%s1078] sm:$0xff]
      %v1080 = vld [vmem:[%s1078 + $0x8] sm:$0xff]
      %v1081 = vld [vmem:[%s1078 + $0x10] sm:$0xff]
      %v1082 = vld [vmem:[%s1078 + $0x18] sm:$0xff]
      %v1083 = vld [vmem:[%s1078 + $0x20] sm:$0xff]
      %v1084 = vld [vmem:[%s1078 + $0x28] sm:$0xff]
      %v1085 = vld [vmem:[%s1078 + $0x30] sm:$0xff]
      %v1086 = vld [vmem:[%s1078 + $0x38] sm:$0xff]
      %v1087 = vld [vmem:[%s1078 + $0x40] sm:$0xff]
      %v1088 = vld [vmem:[%s1078 + $0x48] sm:$0xff]
      %v1089 = vld [vmem:[%s1078 + $0x50] sm:$0xff]
      %v1090 = vld [vmem:[%s1078 + $0x58] sm:$0xff]
      %v1091 = vld [vmem:[%s1078 + $0x60] sm:$0xff]
      %v1092 = vld [vmem:[%s1078 + $0x68] sm:$0xff]
      %v1093 = vld [vmem:[%s1078 + $0x70] sm:$0xff]
      %v1094 = vld [vmem:[%s1078 + $0x78] sm:$0xff]
      %s1095 = scalar_lea.vmem %s5, 2
      %v1096 = vld [vmem:[%s1095] sm:$0x1]
      %v1098 = vperm.slane %v1096, 0
      %1100 = vmatpush.msra.mxu0 %v1094
      %1101 = vmatpush.msra.mxu0 %v1093
      %1102 = vmatpush.msra.mxu0 %v1092
      %1103 = vmatpush.msra.mxu0 %v1091
      %1104 = vmatpush.msra.mxu0 %v1090
      %1105 = vmatpush.msra.mxu0 %v1089
      %1106 = vmatpush.msra.mxu0 %v1088
      %1107 = vmatpush.msra.mxu0 %v1087
      %1108 = vmatpush.msra.mxu0 %v1086
      %1109 = vmatpush.msra.mxu0 %v1085
      %1110 = vmatpush.msra.mxu0 %v1084
      %1111 = vmatpush.msra.mxu0 %v1083
      %1112 = vmatpush.msra.mxu0 %v1082
      %1113 = vmatpush.msra.mxu0 %v1081
      %1114 = vmatpush.msra.mxu0 %v1080
      %1115 = vmatpush.msra.mxu0 %v1079
      %1116 = vmatmul.f32.gmra.mxu0 %v1062
      %v1117 = vpop.f32.mrf.mxu0
      %v1118 = vadd.f32 %v1098, %v1117
      %1119 = vmatmul.f32.gmra.mxu0 %v1063
      %v1120 = vpop.f32.mrf.mxu0
      %v1121 = vadd.f32 %v1098, %v1120
      %1122 = vmatmul.f32.gmra.mxu0 %v1064
      %v1123 = vpop.f32.mrf.mxu0
      %v1124 = vadd.f32 %v1098, %v1123
      %1125 = vmatmul.f32.gmra.mxu0 %v1065
      %v1126 = vpop.f32.mrf.mxu0
      %v1127 = vadd.f32 %v1098, %v1126
      %1128 = vmatmul.f32.gmra.mxu0 %v1066
      %v1129 = vpop.f32.mrf.mxu0
      %v1130 = vadd.f32 %v1098, %v1129
      %1131 = vmatmul.f32.gmra.mxu0 %v1067
      %v1132 = vpop.f32.mrf.mxu0
      %v1133 = vadd.f32 %v1098, %v1132
      %1134 = vmatmul.f32.gmra.mxu0 %v1068
      %v1135 = vpop.f32.mrf.mxu0
      %v1136 = vadd.f32 %v1098, %v1135
      %1137 = vmatmul.f32.gmra.mxu0 %v1069
      %v1138 = vpop.f32.mrf.mxu0
      %v1139 = vadd.f32 %v1098, %v1138
      %1140 = vmatmul.f32.gmra.mxu0 %v1070
      %v1141 = vpop.f32.mrf.mxu0
      %v1142 = vadd.f32 %v1098, %v1141
      %1143 = vmatmul.f32.gmra.mxu0 %v1071
      %v1144 = vpop.f32.mrf.mxu0
      %v1145 = vadd.f32 %v1098, %v1144
      %1146 = vmatmul.f32.gmra.mxu0 %v1072
      %v1147 = vpop.f32.mrf.mxu0
      %v1148 = vadd.f32 %v1098, %v1147
      %1149 = vmatmul.f32.gmra.mxu0 %v1073
      %v1150 = vpop.f32.mrf.mxu0
      %v1151 = vadd.f32 %v1098, %v1150
      %1152 = vmatmul.f32.gmra.mxu0 %v1074
      %v1153 = vpop.f32.mrf.mxu0
      %v1154 = vadd.f32 %v1098, %v1153
      %1155 = vmatmul.f32.gmra.mxu0 %v1075
      %v1156 = vpop.f32.mrf.mxu0
      %v1157 = vadd.f32 %v1098, %v1156
      %1158 = vmatmul.f32.gmra.mxu0 %v1076
      %v1159 = vpop.f32.mrf.mxu0
      %v1160 = vadd.f32 %v1098, %v1159
      %1161 = vmatmul.f32.gmra.mxu0 %v1077
      %v1162 = vpop.f32.mrf.mxu0
      %v1163 = vadd.f32 %v1098, %v1162
      %1164 = vdwg.mxu0
      %v1165 = vmul.f32 %v1118, %v1118
      %v1166 = vmul.f32 %v1121, %v1121
      %v1167 = vmul.f32 %v1124, %v1124
      %v1168 = vmul.f32 %v1127, %v1127
      %v1169 = vmul.f32 %v1130, %v1130
      %v1170 = vmul.f32 %v1133, %v1133
      %v1171 = vmul.f32 %v1136, %v1136
      %v1172 = vmul.f32 %v1139, %v1139
      %v1173 = vmul.f32 %v1142, %v1142
      %v1174 = vmul.f32 %v1145, %v1145
      %v1175 = vmul.f32 %v1148, %v1148
      %v1176 = vmul.f32 %v1151, %v1151
      %v1177 = vmul.f32 %v1154, %v1154
      %v1178 = vmul.f32 %v1157, %v1157
      %v1179 = vmul.f32 %v1160, %v1160
      %v1180 = vmul.f32 %v1163, %v1163
      %v1181 = vmul.f32 %v1118, %v1165
      %v1182 = vmul.f32 %v1121, %v1166
      %v1183 = vmul.f32 %v1124, %v1167
      %v1184 = vmul.f32 %v1127, %v1168
      %v1185 = vmul.f32 %v1130, %v1169
      %v1186 = vmul.f32 %v1133, %v1170
      %v1187 = vmul.f32 %v1136, %v1171
      %v1188 = vmul.f32 %v1139, %v1172
      %v1189 = vmul.f32 %v1142, %v1173
      %v1190 = vmul.f32 %v1145, %v1174
      %v1191 = vmul.f32 %v1148, %v1175
      %v1192 = vmul.f32 %v1151, %v1176
      %v1193 = vmul.f32 %v1154, %v1177
      %v1194 = vmul.f32 %v1157, %v1178
      %v1195 = vmul.f32 %v1160, %v1179
      %v1196 = vmul.f32 %v1163, %v1180
      %v1197 = vmul.f32 %v1181, 0.044715
      %v1198 = vmul.f32 %v1182, 0.044715
      %v1199 = vmul.f32 %v1183, 0.044715
      %v1200 = vmul.f32 %v1184, 0.044715
      %v1201 = vmul.f32 %v1185, 0.044715
      %v1202 = vmul.f32 %v1186, 0.044715
      %v1203 = vmul.f32 %v1187, 0.044715
      %v1204 = vmul.f32 %v1188, 0.044715
      %v1205 = vmul.f32 %v1189, 0.044715
      %v1206 = vmul.f32 %v1190, 0.044715
      %v1207 = vmul.f32 %v1191, 0.044715
      %v1208 = vmul.f32 %v1192, 0.044715
      %v1209 = vmul.f32 %v1193, 0.044715
      %v1210 = vmul.f32 %v1194, 0.044715
      %v1211 = vmul.f32 %v1195, 0.044715
      %v1212 = vmul.f32 %v1196, 0.044715
      %v1213 = vadd.f32 %v1118, %v1197
      %v1214 = vadd.f32 %v1121, %v1198
      %v1215 = vadd.f32 %v1124, %v1199
      %v1216 = vadd.f32 %v1127, %v1200
      %v1217 = vadd.f32 %v1130, %v1201
      %v1218 = vadd.f32 %v1133, %v1202
      %v1219 = vadd.f32 %v1136, %v1203
      %v1220 = vadd.f32 %v1139, %v1204
      %v1221 = vadd.f32 %v1142, %v1205
      %v1222 = vadd.f32 %v1145, %v1206
      %v1223 = vadd.f32 %v1148, %v1207
      %v1224 = vadd.f32 %v1151, %v1208
      %v1225 = vadd.f32 %v1154, %v1209
      %v1226 = vadd.f32 %v1157, %v1210
      %v1227 = vadd.f32 %v1160, %v1211
      %v1228 = vadd.f32 %v1163, %v1212
      %v1229 = vmul.f32 %v1213, 0.7978846
      %v1230 = vmul.f32 %v1214, 0.7978846
      %v1231 = vmul.f32 %v1215, 0.7978846
      %v1232 = vmul.f32 %v1216, 0.7978846
      %v1233 = vmul.f32 %v1217, 0.7978846
      %v1234 = vmul.f32 %v1218, 0.7978846
      %v1235 = vmul.f32 %v1219, 0.7978846
      %v1236 = vmul.f32 %v1220, 0.7978846
      %v1237 = vmul.f32 %v1221, 0.7978846
      %v1238 = vmul.f32 %v1222, 0.7978846
      %v1239 = vmul.f32 %v1223, 0.7978846
      %v1240 = vmul.f32 %v1224, 0.7978846
      %v1241 = vmul.f32 %v1225, 0.7978846
      %v1242 = vmul.f32 %v1226, 0.7978846
      %v1243 = vmul.f32 %v1227, 0.7978846
      %v1244 = vmul.f32 %v1228, 0.7978846
      %v1245 = vtanh.pop %v1229
      %v1246 = vtanh.pop %v1230
      %v1247 = vtanh.pop %v1231
      %v1248 = vtanh.pop %v1232
      %v1249 = vtanh.pop %v1233
      %v1250 = vtanh.pop %v1234
      %v1251 = vtanh.pop %v1235
      %v1252 = vtanh.pop %v1236
      %v1253 = vtanh.pop %v1237
      %v1254 = vtanh.pop %v1238
      %v1255 = vtanh.pop %v1239
      %v1256 = vtanh.pop %v1240
      %v1257 = vtanh.pop %v1241
      %v1258 = vtanh.pop %v1242
      %v1259 = vtanh.pop %v1243
      %v1260 = vtanh.pop %v1244
      %v1261 = vadd.f32 %v1245, 1.0
      %v1262 = vadd.f32 %v1246, 1.0
      %v1263 = vadd.f32 %v1247, 1.0
      %v1264 = vadd.f32 %v1248, 1.0
      %v1265 = vadd.f32 %v1249, 1.0
      %v1266 = vadd.f32 %v1250, 1.0
      %v1267 = vadd.f32 %v1251, 1.0
      %v1268 = vadd.f32 %v1252, 1.0
      %v1269 = vadd.f32 %v1253, 1.0
      %v1270 = vadd.f32 %v1254, 1.0
      %v1271 = vadd.f32 %v1255, 1.0
      %v1272 = vadd.f32 %v1256, 1.0
      %v1273 = vadd.f32 %v1257, 1.0
      %v1274 = vadd.f32 %v1258, 1.0
      %v1275 = vadd.f32 %v1259, 1.0
      %v1276 = vadd.f32 %v1260, 1.0
      %v1277 = vmul.f32 %v1261, 0.5
      %v1278 = vmul.f32 %v1262, 0.5
      %v1279 = vmul.f32 %v1263, 0.5
      %v1280 = vmul.f32 %v1264, 0.5
      %v1281 = vmul.f32 %v1265, 0.5
      %v1282 = vmul.f32 %v1266, 0.5
      %v1283 = vmul.f32 %v1267, 0.5
      %v1284 = vmul.f32 %v1268, 0.5
      %v1285 = vmul.f32 %v1269, 0.5
      %v1286 = vmul.f32 %v1270, 0.5
      %v1287 = vmul.f32 %v1271, 0.5
      %v1288 = vmul.f32 %v1272, 0.5
      %v1289 = vmul.f32 %v1273, 0.5
      %v1290 = vmul.f32 %v1274, 0.5
      %v1291 = vmul.f32 %v1275, 0.5
      %v1292 = vmul.f32 %v1276, 0.5
      %v1293 = vmul.f32 %v1118, %v1277
      %v1294 = vmul.f32 %v1121, %v1278
      %v1295 = vmul.f32 %v1124, %v1279
      %v1296 = vmul.f32 %v1127, %v1280
      %v1297 = vmul.f32 %v1130, %v1281
      %v1298 = vmul.f32 %v1133, %v1282
      %v1299 = vmul.f32 %v1136, %v1283
      %v1300 = vmul.f32 %v1139, %v1284
      %v1301 = vmul.f32 %v1142, %v1285
      %v1302 = vmul.f32 %v1145, %v1286
      %v1303 = vmul.f32 %v1148, %v1287
      %v1304 = vmul.f32 %v1151, %v1288
      %v1305 = vmul.f32 %v1154, %v1289
      %v1306 = vmul.f32 %v1157, %v1290
      %v1307 = vmul.f32 %v1160, %v1291
      %v1308 = vmul.f32 %v1163, %v1292
      %v1309 = vadd.f32 %v1293, %v1062
      %v1310 = vadd.f32 %v1294, %v1063
      %v1311 = vadd.f32 %v1295, %v1064
      %v1312 = vadd.f32 %v1296, %v1065
      %v1313 = vadd.f32 %v1297, %v1066
      %v1314 = vadd.f32 %v1298, %v1067
      %v1315 = vadd.f32 %v1299, %v1068
      %v1316 = vadd.f32 %v1300, %v1069
      %v1317 = vadd.f32 %v1301, %v1070
      %v1318 = vadd.f32 %v1302, %v1071
      %v1319 = vadd.f32 %v1303, %v1072
      %v1320 = vadd.f32 %v1304, %v1073
      %v1321 = vadd.f32 %v1305, %v1074
      %v1322 = vadd.f32 %v1306, %v1075
      %v1323 = vadd.f32 %v1307, %v1076
      %v1324 = vadd.f32 %v1308, %v1077
      %v1325 = vld [vmem:[%s1] sm:$0xff]
      %1326 = vmatpush.msra.mxu0 %v1324
      %1327 = vmatpush.msra.mxu0 %v1323
      %1328 = vmatpush.msra.mxu0 %v1322
      %1329 = vmatpush.msra.mxu0 %v1321
      %1330 = vmatpush.msra.mxu0 %v1320
      %1331 = vmatpush.msra.mxu0 %v1319
      %1332 = vmatpush.msra.mxu0 %v1318
      %1333 = vmatpush.msra.mxu0 %v1317
      %1334 = vmatpush.msra.mxu0 %v1316
      %1335 = vmatpush.msra.mxu0 %v1315
      %1336 = vmatpush.msra.mxu0 %v1314
      %1337 = vmatpush.msra.mxu0 %v1313
      %1338 = vmatpush.msra.mxu0 %v1312
      %1339 = vmatpush.msra.mxu0 %v1311
      %1340 = vmatpush.msra.mxu0 %v1310
      %1341 = vmatpush.msra.mxu0 %v1309
      %1342 = vmatmul.f32.gmra.mxu0 %v1325
      %v1343 = vpop.f32.mrf.mxu0
      %v1344 = vadd.f32 0.0, %v1343
      %1345 = vdwg.mxu0
      %v1346 = vld [vmem:[%s6] sm:$0xff]
      %v1347 = vld [vmem:[%s6 + $0x8] sm:$0xff]
      %v1348 = vld [vmem:[%s6 + $0x10] sm:$0xff]
      %v1349 = vld [vmem:[%s6 + $0x18] sm:$0xff]
      %v1350 = vld [vmem:[%s6 + $0x20] sm:$0xff]
      %v1351 = vld [vmem:[%s6 + $0x28] sm:$0xff]
      %v1352 = vld [vmem:[%s6 + $0x30] sm:$0xff]
      %v1353 = vld [vmem:[%s6 + $0x38] sm:$0xff]
      %v1354 = vld [vmem:[%s6 + $0x40] sm:$0xff]
      %v1355 = vld [vmem:[%s6 + $0x48] sm:$0xff]
      %v1356 = vld [vmem:[%s6 + $0x50] sm:$0xff]
      %v1357 = vld [vmem:[%s6 + $0x58] sm:$0xff]
      %v1358 = vld [vmem:[%s6 + $0x60] sm:$0xff]
      %v1359 = vld [vmem:[%s6 + $0x68] sm:$0xff]
      %v1360 = vld [vmem:[%s6 + $0x70] sm:$0xff]
      %v1361 = vld [vmem:[%s6 + $0x78] sm:$0xff]
      %v1362 = vld [vmem:[%s7] sm:$0x1]
      %v1364 = vperm.slane %v1362, 0
      %1366 = vmatpush.msra.mxu0 %v1361
      %1367 = vmatpush.msra.mxu0 %v1360
      %1368 = vmatpush.msra.mxu0 %v1359
      %1369 = vmatpush.msra.mxu0 %v1358
      %1370 = vmatpush.msra.mxu0 %v1357
      %1371 = vmatpush.msra.mxu0 %v1356
      %1372 = vmatpush.msra.mxu0 %v1355
      %1373 = vmatpush.msra.mxu0 %v1354
      %1374 = vmatpush.msra.mxu0 %v1353
      %1375 = vmatpush.msra.mxu0 %v1352
      %1376 = vmatpush.msra.mxu0 %v1351
      %1377 = vmatpush.msra.mxu0 %v1350
      %1378 = vmatpush.msra.mxu0 %v1349
      %1379 = vmatpush.msra.mxu0 %v1348
      %1380 = vmatpush.msra.mxu0 %v1347
      %1381 = vmatpush.msra.mxu0 %v1346
      %1382 = vmatmul.f32.gmra.mxu0 %v1344
      %v1383 = vpop.f32.mrf.mxu0
      %v1384 = vadd.f32 %v1364, %v1383
      %1385 = vdwg.mxu0
      %1386 = vst [vmem:[%s305] sm:$0xff] %v1384
      %p1387 = scmp.lt.s32.totalorder %s19, 1
      %s1388 = scalar_select %p1387, %s19, 1
      %s1389 = smul.addr %s1388, 8
      %s1390 = scalar_lea.vmem %s8, %s1389
      // Predicated region
      $region53: #{modified_wav2vec2_ser_forward.1} parent=51 // pred_check
        %p1391 = pneg %p210
      $region54: #{modified_wav2vec2_ser_forward.1} parent=51 // pred_check_branch
        %1393 = sbr.rel (%p1391) target = $region56
      $region55: #{modified_wav2vec2_ser_forward.1} parent=51 // pred_region
        _
      $region56: #{modified_wav2vec2_ser_forward.1} parent=51 // pred_fallthru
        _
    $region52: #{modified_wav2vec2_ser_forward.1} parent=5 // pred_fallthru
      _
    %p1394 = scmp.le.s32.totalorder 2, %s14
    // Predicated region
    $region57: #{modified_wav2vec2_ser_forward.1} parent=5 // pred_check
      %p1395 = pneg %p1394
    $region58: #{modified_wav2vec2_ser_forward.1} parent=5 // pred_check_branch
      %1397 = sbr.rel (%p1395) target = $region60
    $region59: #{modified_wav2vec2_ser_forward.1} parent=5 // pred_region
      %s1398 = ssub.s32 %s14, 2
      // Predicated region
      $region61: #{modified_wav2vec2_ser_forward.1} parent=59 // pred_check
        %p1399 = pneg %p216
      $region62: #{modified_wav2vec2_ser_forward.1} parent=59 // pred_check_branch
        %1401 = sbr.rel (%p1399) target = $region64
      $region63: #{modified_wav2vec2_ser_forward.1} parent=59 // pred_region
        %p1402 = scmp.lt.s32.totalorder %s20, 1
        %s1403 = scalar_select %p1402, %s20, 1
        %s1404 = smul.addr %s1403, 8
        %s1405 = scalar_lea.vmem %s8, %s1404
      $region64: #{modified_wav2vec2_ser_forward.1} parent=59 // pred_fallthru
        _
    $region60: #{modified_wav2vec2_ser_forward.1} parent=5 // pred_fallthru
      _
  $region6: #{modified_wav2vec2_ser_forward.1} parent=0 // loop_footer
    %s18 = sadd.s32 1, %s14
  $region7: #{modified_wav2vec2_ser_forward.1} parent=0 // loop_footer_branch
    %13 = sbr.rel target = $region3
  $region8: #{modified_wav2vec2_ser_forward.1} parent=0 // loop_exit
    _

</llo_original>
